<compile_context>
chip_gen: v7x
topology: tpu7x:2x2x1
jax: 0.10.0
libtpu: 0.0.40
codegen_flags: <defaults>
</compile_context>

<pallas_src>
import functools

import jax
import jax.numpy as jnp
import numpy as np
from jax import lax
from jax.experimental import pallas as pl
from jax.experimental.pallas import tpu as pltpu


def _round_up(x, m):
    return ((x + m - 1) // m) * m


def _cdiv(a, b):
    return (a + b - 1) // b


def _choose_point_tile(m, target=16384):
    """Lane-dense point tile: big (amortize ~0.35us/step), multiple of 128, but keep
    >= 2 tiles so the 'parallel' grid axis can split across v7x's two TensorCores.
    On single-TC parts (v5e/v6e) raising `target` further is fine."""
    t = min(_round_up(target, 128), _round_up(m, 128))
    if m > 128 and _cdiv(m, t) < 2:
        t = max(128, _round_up(_cdiv(m, 2), 128))
    return t


def _point_attn_kernel(f_ref, wmlp_ref, a_ref):
    # f_ref    : (C, TM) f32  point features, channels on sublanes / points on lanes
    # wmlp_ref : (C, C)  f32  Conv1d(1x1) weight (rows = output channel)
    # a_ref    : (C, TM) f32  softmax(W_mlp f) * f per point
    f = f_ref[...]
    s = jnp.dot(wmlp_ref[...], f, preferred_element_type=jnp.float32)   # (C, TM)
    s = s - jnp.max(s, axis=0, keepdims=True)                           # softmax over C
    e = jnp.exp(s)
    p = e / jnp.sum(e, axis=0, keepdims=True)                           # exact reciprocal
    a_ref[...] = p * f


def _stats_kernel(att_ref, wlin_ref, sum_ref, ssq_ref, *, m_total, tm):
    # Per-tile sum and sum-of-squares of y = W_lin @ attended (bias-free), with the
    # ragged tail masked in-kernel so no XLA-side padding of `att` is needed.
    att = att_ref[...]                                                  # (C, TM) f32
    y = jnp.dot(wlin_ref[...], att, preferred_element_type=jnp.float32)  # (out_c, TM)
    col = pl.program_id(0) * tm + lax.broadcasted_iota(jnp.int32, y.shape, 1)
    y = jnp.where(col < m_total, y, 0.0)
    sum_ref[...] = jnp.sum(y, axis=1, keepdims=True)[None]              # (1, out_c, 1)
    ssq_ref[...] = jnp.sum(y * y, axis=1, keepdims=True)[None]          # (1, out_c, 1)


def _linear_bn_kernel(att_ref, wfold_ref, bfold_ref, out_ref):
    # Final Linear with BatchNorm folded in: out = (scale*W_lin) @ att + shift.
    att = att_ref[...]                                                  # (C, TM) f32
    y = jnp.dot(wfold_ref[...], att, preferred_element_type=jnp.float32)  # (out_c, TM)
    out_ref[...] = y + bfold_ref[...]                                   # lane-dense store


def randlanet_forward(feature, neigh_indexs, permatrix, params, *, k, tm_target=16384):
    """feature: (B, in_c, N) f32; neigh_indexs: (M, k) int32 flat row indices in [0, M).
    permatrix is accepted for signature parity but unused by the PyTorch forward."""
    del permatrix  # unused in the original forward pass
    B, C, N = feature.shape
    M = B * N
    out_c = params["w_lin"].shape[0]

    w_mlp = params["w_mlp"].astype(jnp.float32)      # (C, C)
    w_lin = params["w_lin"].astype(jnp.float32)      # (out_c, C)
    gamma = params["bn_gamma"].astype(jnp.float32)
    beta = params["bn_beta"].astype(jnp.float32)
    # params["b_lin"] adds a per-channel constant that cancels under training-mode
    # BatchNorm centering, so it is dropped (eval-mode BN with running stats differs).

    tm = _choose_point_tile(M, tm_target)
    ntiles = _cdiv(M, tm)
    parallel = pltpu.CompilerParams(dimension_semantics=("parallel",))

    # Single layout transpose to lane-dense (C, M) (channel on sublanes, flat point
    # index m = b*N + n on lanes).  Everything downstream stays in this layout.
    f_cm = jnp.transpose(feature, (1, 0, 2)).reshape(C, M).astype(jnp.float32)

    # Kernel A: per-point a = softmax(W_mlp f) * f.
    a_cm = pl.pallas_call(
        _point_attn_kernel,
        out_shape=jax.ShapeDtypeStruct((C, M), jnp.float32),
        grid=(ntiles,),
        in_specs=[pl.BlockSpec((C, tm), lambda i: (0, i)),
                  pl.BlockSpec((C, C), lambda i: (0, 0))],
        out_specs=pl.BlockSpec((C, tm), lambda i: (0, i)),
        compiler_params=parallel,
    )(f_cm, w_mlp)

    # Neighbor aggregation attended[:, m] = sum_j a[:, neigh[m, j]], done directly in
    # (C, M) layout (no transposes, no (M, k, C) re-layout, no pads).
    # TODO(synk): a fully in-kernel gather would need per-row dynamic loads / DMA from
    # a VMEM-resident table (no rectangular BlockSpec expresses it), so it stays in XLA.
    neigh = neigh_indexs.reshape(M, k).astype(jnp.int32)
    att_cm = jnp.sum(a_cm[:, neigh], axis=-1)                           # (C, M) f32

    # Kernel B: per-tile sum and sum-of-squares of y = W_lin @ attended (BatchNorm
    # batch statistics), with the channel sum folded in as a second output.
    stats_kernel = functools.partial(_stats_kernel, m_total=M, tm=tm)
    sum_parts, ssq_parts = pl.pallas_call(
        stats_kernel,
        out_shape=(jax.ShapeDtypeStruct((ntiles, out_c, 1), jnp.float32),
                   jax.ShapeDtypeStruct((ntiles, out_c, 1), jnp.float32)),
        grid=(ntiles,),
        in_specs=[pl.BlockSpec((C, tm), lambda i: (0, i)),
                  pl.BlockSpec((out_c, C), lambda i: (0, 0))],
        out_specs=(pl.BlockSpec((1, out_c, 1), lambda i: (i, 0, 0)),
                   pl.BlockSpec((1, out_c, 1), lambda i: (i, 0, 0))),
        compiler_params=parallel,
    )(att_cm, w_lin)
    mean_y = jnp.sum(sum_parts, axis=0)[:, 0] / M                       # (out_c,)
    var_y = jnp.maximum(jnp.sum(ssq_parts, axis=0)[:, 0] / M - mean_y ** 2, 0.0)

    # Fold training-mode BatchNorm1d (biased variance, eps=1e-5) into the Linear.
    scale = gamma * jax.lax.rsqrt(var_y + 1e-5)                         # (out_c,)
    w_fold = scale[:, None] * w_lin                                     # (out_c, C)
    b_fold = (beta - scale * mean_y).reshape(out_c, 1)                  # (out_c, 1)

    # Kernel C: fused Linear + BatchNorm with lane-dense (out_c, TM) output tiles.
    out_cm = pl.pallas_call(
        _linear_bn_kernel,
        out_shape=jax.ShapeDtypeStruct((out_c, M), jnp.float32),
        grid=(ntiles,),
        in_specs=[pl.BlockSpec((C, tm), lambda i: (0, i)),
                  pl.BlockSpec((out_c, C), lambda i: (0, 0)),
                  pl.BlockSpec((out_c, 1), lambda i: (0, 0))],
        out_specs=pl.BlockSpec((out_c, tm), lambda i: (0, i)),
        compiler_params=parallel,
    )(att_cm, w_fold, b_fold)

    return out_cm.reshape(out_c, B, N).transpose(1, 0, 2)               # (B, out_c, N)


def randlanet_reference(feature, neigh_indexs, params, *, k):
    """Pure-JAX f32 reference mirroring the PyTorch forward (training-mode BN)."""
    B, C, N = feature.shape
    M = B * N
    feat_flat = jnp.transpose(feature, (0, 2, 1)).reshape(M, C)
    neigh_feats = feat_flat[neigh_indexs.reshape(-1)].reshape(M, k, C)
    s = jnp.einsum("mkc,oc->mko", neigh_feats, params["w_mlp"], precision="highest")
    p = jax.nn.softmax(s, axis=-1)                                      # softmax over channels
    attended = jnp.sum(p * neigh_feats, axis=1)                         # sum over k
    out = jnp.dot(attended, params["w_lin"].T, precision="highest") + params["b_lin"]
    mean = jnp.mean(out, axis=0)
    var = jnp.mean((out - mean) ** 2, axis=0)
    normed = (out - mean) / jnp.sqrt(var + 1e-5) * params["bn_gamma"] + params["bn_beta"]
    return normed.reshape(B, N, -1).transpose(0, 2, 1)


if __name__ == "__main__":
    B, N, in_c, out_c, k = 2, 1000, 8, 16, 8
    M = B * N

    key = jax.random.PRNGKey(0)
    k_feat, k_idx, k_perm, k_wmlp, k_wlin, k_blin, k_g, k_b = jax.random.split(key, 8)

    feature = jax.random.normal(k_feat, (B, in_c, N), dtype=jnp.float32)
    neigh_indexs = jax.random.randint(k_idx, (M, k), 0, M, dtype=jnp.int32)
    permatrix = jax.random.normal(k_perm, (M, k, k), dtype=jnp.float32)  # unused by forward

    params = {
        "w_mlp": 0.3 * jax.random.normal(k_wmlp, (in_c, in_c), jnp.float32),   # Conv1d 1x1, no bias
        "w_lin": 0.3 * jax.random.normal(k_wlin, (out_c, in_c), jnp.float32),  # Linear weight
        "b_lin": 0.1 * jax.random.normal(k_blin, (out_c,), jnp.float32),       # Linear bias
        "bn_gamma": 1.0 + 0.1 * jax.random.normal(k_g, (out_c,), jnp.float32),
        "bn_beta": 0.1 * jax.random.normal(k_b, (out_c,), jnp.float32),
    }

    fwd = jax.jit(lambda f, n, p: randlanet_forward(f, n, p, params, k=k))
    out = jax.block_until_ready(fwd(feature, neigh_indexs, permatrix))
    assert out.shape == (B, out_c, N), out.shape

    ref = randlanet_reference(feature, neigh_indexs, params, k=k)
    np.testing.assert_allclose(np.asarray(out), np.asarray(ref), atol=1e-2, rtol=1e-2)

    print("KERNEL_OK")
</pallas_src>

<mosaic_0001>
module attributes {stable_mosaic.version = 11 : i64} {
  func.func @_point_attn_kernel(%arg0: i32, %arg1: memref<8x1024xf32, #tpu.memory_space<vmem>>, %arg2: memref<8x8xf32, #tpu.memory_space<vmem>>, %arg3: memref<8x1024xf32, #tpu.memory_space<vmem>>) attributes {dimension_semantics = [#tpu.dimension_semantics<parallel>], iteration_bounds = array<i64: 2>, scalar_prefetch = 0 : i64, scratch_operands = 0 : i64, tpu.core_type = #tpu.core_type<tc>, window_params = [{transform_indices = @transform_0, window_bounds = array<i64: 8, 1024>}, {pipeline_mode = #tpu.pipeline_mode<synchronous>, transform_indices = @transform_1, window_bounds = array<i64: 8, 8>}, {transform_indices = @transform_2, window_bounds = array<i64: 8, 1024>}]} {
    %c0 = arith.constant 0 : index
    %c0_0 = arith.constant 0 : index
    %0 = vector.load %arg1[%c0, %c0_0] : memref<8x1024xf32, #tpu.memory_space<vmem>>, vector<8x1024xf32>
    %c0_1 = arith.constant 0 : index
    %c0_2 = arith.constant 0 : index
    %1 = vector.load %arg2[%c0_1, %c0_2] : memref<8x8xf32, #tpu.memory_space<vmem>>, vector<8x8xf32>
    %cst = arith.constant dense<0.000000e+00> : vector<8x1024xf32>
    %2 = tpu.matmul %1, %0, %cst {dimension_numbers = #tpu.dot_dimension_numbers<[1], [0], [0], [1], [0, 0, 1, 1], [], []>} : vector<8x8xf32>, vector<8x1024xf32>, vector<8x1024xf32> -> vector<8x1024xf32>
    %cst_3 = arith.constant dense<0xFF800000> : vector<1024xf32>
    %3 = vector.multi_reduction <maximumf>, %2, %cst_3 [0] : vector<8x1024xf32> to vector<1024xf32>
    %4 = vector.shape_cast %3 : vector<1024xf32> to vector<1x1024xf32>
    %5 = vector.broadcast %4 : vector<1x1024xf32> to vector<8x1024xf32>
    %6 = arith.subf %2, %5 : vector<8x1024xf32>
    %7 = math.exp %6 : vector<8x1024xf32>
    %cst_4 = arith.constant dense<0.000000e+00> : vector<1024xf32>
    %8 = vector.multi_reduction <add>, %7, %cst_4 [0] : vector<8x1024xf32> to vector<1024xf32>
    %9 = vector.shape_cast %8 : vector<1024xf32> to vector<1x1024xf32>
    %10 = vector.broadcast %9 : vector<1x1024xf32> to vector<8x1024xf32>
    %11 = arith.divf %7, %10 : vector<8x1024xf32>
    %12 = arith.mulf %11, %0 : vector<8x1024xf32>
    %c0_5 = arith.constant 0 : index
    %c0_6 = arith.constant 0 : index
    %13 = vector.load %arg3[%c0_5, %c0_6] : memref<8x1024xf32, #tpu.memory_space<vmem>>, vector<8x1024xf32>
    tpu.vector_store %arg3[%c0_5, %c0_6], %12 {strides = array<i32>} : memref<8x1024xf32, #tpu.memory_space<vmem>>, vector<8x1024xf32>,
    return
  }
  func.func @transform_0(%arg0: i32) -> (i32, i32) {
    %c0_i32 = arith.constant 0 : i32
    %c0_i32_0 = arith.constant 0 : i32
    return %c0_i32, %arg0 : i32, i32
  }
  func.func @transform_1(%arg0: i32) -> (i32, i32) {
    %c0_i32 = arith.constant 0 : i32
    %c0_i32_0 = arith.constant 0 : i32
    %c0_i32_1 = arith.constant 0 : i32
    return %c0_i32, %c0_i32_0 : i32, i32
  }
  func.func @transform_2(%arg0: i32) -> (i32, i32) {
    %c0_i32 = arith.constant 0 : i32
    %c0_i32_0 = arith.constant 0 : i32
    return %c0_i32, %arg0 : i32, i32
  }
}

module attributes {stable_mosaic.version = 11 : i64} {
  func.func @_stats_kernel(%arg0: i32, %arg1: memref<8x1024xf32, #tpu.memory_space<vmem>>, %arg2: memref<16x8xf32, #tpu.memory_space<vmem>>, %arg3: memref<1x16x1xf32, #tpu.memory_space<vmem>>, %arg4: memref<1x16x1xf32, #tpu.memory_space<vmem>>) attributes {dimension_semantics = [#tpu.dimension_semantics<parallel>], iteration_bounds = array<i64: 2>, scalar_prefetch = 0 : i64, scratch_operands = 0 : i64, tpu.core_type = #tpu.core_type<tc>, window_params = [{transform_indices = @transform_0, window_bounds = array<i64: 8, 1024>}, {pipeline_mode = #tpu.pipeline_mode<synchronous>, transform_indices = @transform_1, window_bounds = array<i64: 16, 8>}, {transform_indices = @transform_2, window_bounds = array<i64: 1, 16, 1>}, {transform_indices = @transform_3, window_bounds = array<i64: 1, 16, 1>}]} {
    %c0 = arith.constant 0 : index
    %c0_0 = arith.constant 0 : index
    %0 = vector.load %arg1[%c0, %c0_0] : memref<8x1024xf32, #tpu.memory_space<vmem>>, vector<8x1024xf32>
    %c0_1 = arith.constant 0 : index
    %c0_2 = arith.constant 0 : index
    %1 = vector.load %arg2[%c0_1, %c0_2] : memref<16x8xf32, #tpu.memory_space<vmem>>, vector<16x8xf32>
    %cst = arith.constant dense<0.000000e+00> : vector<16x1024xf32>
    %2 = tpu.matmul %1, %0, %cst {dimension_numbers = #tpu.dot_dimension_numbers<[1], [0], [0], [1], [0, 0, 1, 1], [], []>} : vector<16x8xf32>, vector<8x1024xf32>, vector<16x1024xf32> -> vector<16x1024xf32>
    %c1024_i32 = arith.constant 1024 : i32
    %3 = arith.muli %arg0, %c1024_i32 : i32
    %4 = tpu.iota {dimensions = array<i32: 1>} : vector<16x1024xi32>
    %5 = vector.broadcast %3 : i32 to vector<16x1024xi32>
    %6 = arith.addi %5, %4 : vector<16x1024xi32>
    %c2000_i32 = arith.constant 2000 : i32
    %7 = vector.broadcast %c2000_i32 : i32 to vector<16x1024xi32>
    %8 = arith.cmpi slt, %6, %7 : vector<16x1024xi32>
    %cst_3 = arith.constant 0.000000e+00 : f32
    %9 = vector.broadcast %cst_3 : f32 to vector<16x1024xf32>
    %10 = arith.select %8, %2, %9 : vector<16x1024xi1>, vector<16x1024xf32>
    %cst_4 = arith.constant dense<0.000000e+00> : vector<16xf32>
    %11 = vector.multi_reduction <add>, %10, %cst_4 [1] : vector<16x1024xf32> to vector<16xf32>
    %12 = vector.shape_cast %11 : vector<16xf32> to vector<16x1xf32>
    %13 = vector.shape_cast %12 : vector<16x1xf32> to vector<1x16x1xf32>
    %c0_5 = arith.constant 0 : index
    %c0_6 = arith.constant 0 : index
    %c0_7 = arith.constant 0 : index
    %14 = vector.load %arg3[%c0_5, %c0_6, %c0_7] : memref<1x16x1xf32, #tpu.memory_space<vmem>>, vector<1x16x1xf32>
    tpu.vector_store %arg3[%c0_5, %c0_6, %c0_7], %13 {strides = array<i32>} : memref<1x16x1xf32, #tpu.memory_space<vmem>>, vector<1x16x1xf32>,
    %15 = arith.mulf %10, %10 : vector<16x1024xf32>
    %cst_8 = arith.constant dense<0.000000e+00> : vector<16xf32>
    %16 = vector.multi_reduction <add>, %15, %cst_8 [1] : vector<16x1024xf32> to vector<16xf32>
    %17 = vector.shape_cast %16 : vector<16xf32> to vector<16x1xf32>
    %18 = vector.shape_cast %17 : vector<16x1xf32> to vector<1x16x1xf32>
    %c0_9 = arith.constant 0 : index
    %c0_10 = arith.constant 0 : index
    %c0_11 = arith.constant 0 : index
    %19 = vector.load %arg4[%c0_9, %c0_10, %c0_11] : memref<1x16x1xf32, #tpu.memory_space<vmem>>, vector<1x16x1xf32>
    tpu.vector_store %arg4[%c0_9, %c0_10, %c0_11], %18 {strides = array<i32>} : memref<1x16x1xf32, #tpu.memory_space<vmem>>, vector<1x16x1xf32>,
    return
  }
  func.func @transform_0(%arg0: i32) -> (i32, i32) {
    %c0_i32 = arith.constant 0 : i32
    %c0_i32_0 = arith.constant 0 : i32
    return %c0_i32, %arg0 : i32, i32
  }
  func.func @transform_1(%arg0: i32) -> (i32, i32) {
    %c0_i32 = arith.constant 0 : i32
    %c0_i32_0 = arith.constant 0 : i32
    %c0_i32_1 = arith.constant 0 : i32
    return %c0_i32, %c0_i32_0 : i32, i32
  }
  func.func @transform_2(%arg0: i32) -> (i32, i32, i32) {
    %c0_i32 = arith.constant 0 : i32
    %c0_i32_0 = arith.constant 0 : i32
    %c0_i32_1 = arith.constant 0 : i32
    return %arg0, %c0_i32, %c0_i32_0 : i32, i32, i32
  }
  func.func @transform_3(%arg0: i32) -> (i32, i32, i32) {
    %c0_i32 = arith.constant 0 : i32
    %c0_i32_0 = arith.constant 0 : i32
    %c0_i32_1 = arith.constant 0 : i32
    return %arg0, %c0_i32, %c0_i32_0 : i32, i32, i32
  }
}

module attributes {stable_mosaic.version = 11 : i64} {
  func.func @_linear_bn_kernel(%arg0: i32, %arg1: memref<8x1024xf32, #tpu.memory_space<vmem>>, %arg2: memref<16x8xf32, #tpu.memory_space<vmem>>, %arg3: memref<16x1xf32, #tpu.memory_space<vmem>>, %arg4: memref<16x1024xf32, #tpu.memory_space<vmem>>) attributes {dimension_semantics = [#tpu.dimension_semantics<parallel>], iteration_bounds = array<i64: 2>, scalar_prefetch = 0 : i64, scratch_operands = 0 : i64, tpu.core_type = #tpu.core_type<tc>, window_params = [{transform_indices = @transform_0, window_bounds = array<i64: 8, 1024>}, {pipeline_mode = #tpu.pipeline_mode<synchronous>, transform_indices = @transform_1, window_bounds = array<i64: 16, 8>}, {pipeline_mode = #tpu.pipeline_mode<synchronous>, transform_indices = @transform_2, window_bounds = array<i64: 16, 1>}, {transform_indices = @transform_3, window_bounds = array<i64: 16, 1024>}]} {
    %c0 = arith.constant 0 : index
    %c0_0 = arith.constant 0 : index
    %0 = vector.load %arg1[%c0, %c0_0] : memref<8x1024xf32, #tpu.memory_space<vmem>>, vector<8x1024xf32>
    %c0_1 = arith.constant 0 : index
    %c0_2 = arith.constant 0 : index
    %1 = vector.load %arg2[%c0_1, %c0_2] : memref<16x8xf32, #tpu.memory_space<vmem>>, vector<16x8xf32>
    %cst = arith.constant dense<0.000000e+00> : vector<16x1024xf32>
    %2 = tpu.matmul %1, %0, %cst {dimension_numbers = #tpu.dot_dimension_numbers<[1], [0], [0], [1], [0, 0, 1, 1], [], []>} : vector<16x8xf32>, vector<8x1024xf32>, vector<16x1024xf32> -> vector<16x1024xf32>
    %c0_3 = arith.constant 0 : index
    %c0_4 = arith.constant 0 : index
    %3 = vector.load %arg3[%c0_3, %c0_4] : memref<16x1xf32, #tpu.memory_space<vmem>>, vector<16x1xf32>
    %4 = vector.broadcast %3 : vector<16x1xf32> to vector<16x1024xf32>
    %5 = arith.addf %2, %4 : vector<16x1024xf32>
    %c0_5 = arith.constant 0 : index
    %c0_6 = arith.constant 0 : index
    %6 = vector.load %arg4[%c0_5, %c0_6] : memref<16x1024xf32, #tpu.memory_space<vmem>>, vector<16x1024xf32>
    tpu.vector_store %arg4[%c0_5, %c0_6], %5 {strides = array<i32>} : memref<16x1024xf32, #tpu.memory_space<vmem>>, vector<16x1024xf32>,
    return
  }
  func.func @transform_0(%arg0: i32) -> (i32, i32) {
    %c0_i32 = arith.constant 0 : i32
    %c0_i32_0 = arith.constant 0 : i32
    return %c0_i32, %arg0 : i32, i32
  }
  func.func @transform_1(%arg0: i32) -> (i32, i32) {
    %c0_i32 = arith.constant 0 : i32
    %c0_i32_0 = arith.constant 0 : i32
    %c0_i32_1 = arith.constant 0 : i32
    return %c0_i32, %c0_i32_0 : i32, i32
  }
  func.func @transform_2(%arg0: i32) -> (i32, i32) {
    %c0_i32 = arith.constant 0 : i32
    %c0_i32_0 = arith.constant 0 : i32
    %c0_i32_1 = arith.constant 0 : i32
    return %c0_i32, %c0_i32_0 : i32, i32
  }
  func.func @transform_3(%arg0: i32) -> (i32, i32) {
    %c0_i32 = arith.constant 0 : i32
    %c0_i32_0 = arith.constant 0 : i32
    return %c0_i32, %arg0 : i32, i32
  }
}

</mosaic_0001>

<llo_original>
// kernel: _lambda_.3
$region0: #{_lambda_.3}
  #allocation0 [shape = 'u32[]', space=smem, size = 0x4, offset = 0x4, fixed_abs, tag = 'smem constant byte address 0x4 - core index']
  #allocation1 [shape = 'u32[144,128]{1,0:T(1,128)}', space=vmem, size = 0x12000, scoped, tag = 'internal scratch']
  %s0 = inlined_call_operand.vmem [shape: f32[8,2000], index: 0, kind: input, shape index: {}]
  %s1 = inlined_call_operand.hbm [shape: f32[8,8], index: 1, kind: input, shape index: {}]
  %s2 = inlined_call_operand.vmem [shape: f32[8,2000], index: 2, kind: output, shape index: {}]
  %s3 = sld [smem:[#allocation0]]
  $region45: #{_lambda_.3} parent=0
    _
  %s5 = ssub.s32 1, %s3
  %s6 = scalar_select 0, %s5, %s3
  $region1: #{_lambda_.3} parent=0
    #allocation2 [shape = 'u8[4096]{0}', space=vmem, size = 0x1000, scoped, tag = 'input window, operand 1, single buffered']
    #allocation3 [shape = 's32[2]{0}', space=sflag, size = 0x8, scoped, tag = 'scoped memory for _lambda_.3']
    %7 = vsyncpa [#allocation3], 0
    loop: start=0, step=1, limit=4
    $region2: #{_lambda_.3} parent=1 // loop_pre_header
      _
    $region3: #{_lambda_.3} parent=1 // loop_header
      %s9 = sphi 0, %s13
      %p10 = scmp.ge.s32.totalorder %s9, 4
      %s19 = sphi 0, %s21
      %s22 = sphi 0, %s19
      %s23 = sphi 0, %s22
      %s39 = sphi 0, %s23
      %s43 = sphi 0, %s43
      %s45 = sphi 0, %s43
      %s46 = sphi 0, %s45
      %s60 = sphi 0, %s46
      %s66 = sphi 0, %s68
      %s69 = sphi 0, %s66
      %s70 = sphi 0, %s69
      %s86 = sphi 0, %s70
    $region4: #{_lambda_.3} parent=1 // loop_header_branch
      %12 = sbr.rel (%p10) target = $region8
    $region5: #{_lambda_.3} parent=1 // loop_body
      %s14 = ssub.s32 %s9, 1
      %s15 = ssub.s32 %s9, 2
      %s16 = sadd.s32 %s9, 1
      %s17 = ssub.s32 %s9, %s16
      %p18 = scmp.eq.s32.totalorder %s17, 0
      %s20 = sadd.s32 %s19, 1
      %s21 = scalar_select %p18, %s19, %s20
      %p24 = pneg %p18
      %p25 = scmp.eq.s32.totalorder %s9, 1
      %p26 = por %p24, %p25
      %p27 = scmp.ne.s32.totalorder %s19, %s22
      %p28 = scmp.eq.s32.totalorder %s9, 0
      %p29 = por %p27, %p28
      %p30 = scmp.ne.s32.totalorder %s19, %s22
      %p31 = scmp.eq.s32.totalorder %s14, 1
      %p32 = por %p30, %p31
      %p33 = scmp.ne.s32.totalorder %s22, %s23
      %p34 = scmp.eq.s32.totalorder %s14, 0
      %p35 = por %p33, %p34
      %p36 = scmp.ne.s32.totalorder %s22, %s23
      %p37 = scmp.eq.s32.totalorder %s15, 1
      %p38 = por %p36, %p37
      %p40 = scmp.ne.s32.totalorder %s23, %s39
      %p41 = scmp.eq.s32.totalorder %s15, 0
      %p42 = por %p40, %p41
      %s44 = sadd.s32 %s43, 1
      %p47 = scmp.eq.s32.totalorder %s9, 1
      %p48 = scmp.ne.s32.totalorder %s43, %s45
      %p49 = scmp.eq.s32.totalorder %s9, 0
      %p50 = por %p48, %p49
      %p51 = scmp.ne.s32.totalorder %s43, %s45
      %p52 = scmp.eq.s32.totalorder %s14, 1
      %p53 = por %p51, %p52
      %p54 = scmp.ne.s32.totalorder %s45, %s46
      %p55 = scmp.eq.s32.totalorder %s14, 0
      %p56 = por %p54, %p55
      %p57 = scmp.ne.s32.totalorder %s45, %s46
      %p58 = scmp.eq.s32.totalorder %s15, 1
      %p59 = por %p57, %p58
      %p61 = scmp.ne.s32.totalorder %s46, %s60
      %p62 = scmp.eq.s32.totalorder %s15, 0
      %p63 = por %p61, %p62
      %s64 = ssub.s32 %s9, %s16
      %p65 = scmp.eq.s32.totalorder %s64, 0
      %s67 = sadd.s32 %s66, 1
      %s68 = scalar_select %p65, %s66, %s67
      %p71 = pneg %p65
      %p72 = scmp.eq.s32.totalorder %s9, 1
      %p73 = por %p71, %p72
      %p74 = scmp.ne.s32.totalorder %s66, %s69
      %p75 = scmp.eq.s32.totalorder %s9, 0
      %p76 = por %p74, %p75
      %p77 = scmp.ne.s32.totalorder %s66, %s69
      %p78 = scmp.eq.s32.totalorder %s14, 1
      %p79 = por %p77, %p78
      %p80 = scmp.ne.s32.totalorder %s69, %s70
      %p81 = scmp.eq.s32.totalorder %s14, 0
      %p82 = por %p80, %p81
      %p83 = scmp.ne.s32.totalorder %s69, %s70
      %p84 = scmp.eq.s32.totalorder %s15, 1
      %p85 = por %p83, %p84
      %p87 = scmp.ne.s32.totalorder %s70, %s86
      %p88 = scmp.eq.s32.totalorder %s15, 0
      %p89 = por %p87, %p88
      %p90 = scmp.le.s32.totalorder 1, %s9
      %p91 = scmp.lt.s32.totalorder %s9, 3
      %p92 = pnand %p90, %p91
      %p93 = pneg %p92
      // Predicated region
      $region9: #{_lambda_.3} parent=5 // pred_check
        _
      $region10: #{_lambda_.3} parent=5 // pred_check_branch
        %95 = sbr.rel (%p92) target = $region12
      $region11: #{_lambda_.3} parent=5 // pred_region
        %s96 = ssub.s32 %s9, 1
        // Predicated region
        $region13: #{_lambda_.3} parent=11 // pred_check
          %p97 = pneg %p56
        $region14: #{_lambda_.3} parent=11 // pred_check_branch
          %99 = sbr.rel (%p97) target = $region16
        $region15: #{_lambda_.3} parent=11 // pred_region
          %s101 = ssub.s32 128, 128
          %102 = vsyncadd [#allocation3], %s101
          %s104 = sshll.u32 [#allocation2], 4
          %s105 = int_to_ptr.vmem [resolvable:$true] %s104
          %107 = dma.hbm_to_vmem [thread:$0]  %s1, 128, %s105, [#allocation3]
        $region16: #{_lambda_.3} parent=11 // pred_fallthru
          _
      $region12: #{_lambda_.3} parent=5 // pred_fallthru
        _
      %p108 = scmp.lt.s32.totalorder %s9, 2
      // Predicated region
      $region17: #{_lambda_.3} parent=5 // pred_check
        %p109 = pneg %p108
      $region18: #{_lambda_.3} parent=5 // pred_check_branch
        %111 = sbr.rel (%p109) target = $region20
      $region19: #{_lambda_.3} parent=5 // pred_region
        // Predicated region
        $region21: #{_lambda_.3} parent=19 // pred_check
          %p112 = pneg %p29
        $region22: #{_lambda_.3} parent=19 // pred_check_branch
          %114 = sbr.rel (%p112) target = $region24
        $region23: #{_lambda_.3} parent=19 // pred_region
          %s115 = smul.u32 8, %s9
          %p116 = scmp.lt.s32.totalorder %s115, 15
          %s117 = scalar_select %p116, %s115, 15
          %s118 = smul.addr %s117, 8
          %s119 = scalar_lea.vmem %s0, %s118
          %s120 = smul.u32 8, %s9
        $region24: #{_lambda_.3} parent=19 // pred_fallthru
          _
      $region20: #{_lambda_.3} parent=5 // pred_fallthru
        _
      %p121 = scmp.le.s32.totalorder 1, %s9
      %p122 = scmp.lt.s32.totalorder %s9, 3
      %p123 = pnand %p121, %p122
      %p124 = pneg %p123
      // Predicated region
      $region25: #{_lambda_.3} parent=5 // pred_check
        _
      $region26: #{_lambda_.3} parent=5 // pred_check_branch
        %126 = sbr.rel (%p123) target = $region28
      $region27: #{_lambda_.3} parent=5 // pred_region
        %s127 = ssub.s32 %s9, 1
        // Predicated region
        $region29: #{_lambda_.3} parent=27 // pred_check
          %p128 = pneg %p56
        $region30: #{_lambda_.3} parent=27 // pred_check_branch
          %130 = sbr.rel (%p128) target = $region32
        $region31: #{_lambda_.3} parent=27 // pred_region
          %131 = dma.done [#allocation3], 128
        $region32: #{_lambda_.3} parent=27 // pred_fallthru
          _
        %s132 = smul.u32 8, %s14
        %p133 = scmp.lt.s32.totalorder %s132, 15
        %s134 = scalar_select %p133, %s132, 15
        %s135 = smul.addr %s134, 8
        %s136 = scalar_lea.vmem %s0, %s135
        %p137 = pneg %p35
        %p138 = pneg %p32
        %p139 = pneg %p56
        %p140 = pneg %p53
        %p141 = pneg %p82
        %p142 = pneg %p79
        %s143 = smul.u32 8, %s14
        %p144 = scmp.lt.s32.totalorder %s143, 15
        %s145 = scalar_select %p144, %s143, 15
        %s146 = smul.addr %s145, 8
        %s147 = scalar_lea.vmem %s2, %s146
        %s148 = smul.u32 8, %s14
        %p149 = scmp.lt.s32.totalorder %s148, 15
        %s150 = scalar_select %p149, %s148, 15
        %s151 = smul.addr %s150, 8
        %s152 = scalar_lea.vmem %s0, %s151
        %s153 = smul.u32 8, %s14
        %s154 = smul.u32 8, %s14
        %p155 = scmp.lt.s32.totalorder %s154, 15
        %s156 = scalar_select %p155, %s154, 15
        %s157 = smul.addr %s156, 8
        %s158 = scalar_lea.vmem %s2, %s157
        %s159 = smul.u32 8, %s14
        %v160 = vld [vmem:[%s152] sm:$0xff]
        %v161 = vld [vmem:[%s152 + $0x8] sm:$0xff]
        %v162 = vld [vmem:[%s152 + $0x10] sm:$0xff]
        %v163 = vld [vmem:[%s152 + $0x18] sm:$0xff]
        %v164 = vld [vmem:[%s152 + $0x20] sm:$0xff]
        %v165 = vld [vmem:[%s152 + $0x28] sm:$0xff]
        %v166 = vld [vmem:[%s152 + $0x30] sm:$0xff]
        %v167 = vld [vmem:[%s152 + $0x38] sm:$0xff]
        %v168 = vld [vmem:[#allocation2] sm:$0xff]
        %vm169 = vcmask 64512
        %v171 = vsel %vm169, %v168, 0
        %173 = vmatprep.subr.mxu0 %v161
        %174 = vmatpush1.msra.mxu0 %v160
        %175 = vmatprep.subr.mxu0 0.0
        %176 = vmatpush1.msra.mxu0 0.0
        %177 = vmatprep.subr.mxu0 0.0
        %178 = vmatpush1.msra.mxu0 0.0
        %179 = vmatprep.subr.mxu0 0.0
        %180 = vmatpush1.msra.mxu0 0.0
        %181 = vmatprep.subr.mxu0 0.0
        %182 = vmatpush1.msra.mxu0 0.0
        %183 = vmatprep.subr.mxu0 0.0
        %184 = vmatpush1.msra.mxu0 0.0
        %185 = vmatprep.subr.mxu0 0.0
        %186 = vmatpush1.msra.mxu0 0.0
        %187 = vmatprep.subr.mxu0 0.0
        %188 = vmatpush1.msra.mxu0 0.0
        %189 = vmatprep.subr.mxu0 0.0
        %190 = vmatpush1.msra.mxu0 0.0
        %191 = vmatprep.subr.mxu0 0.0
        %192 = vmatpush1.msra.mxu0 0.0
        %193 = vmatprep.subr.mxu0 0.0
        %194 = vmatpush1.msra.mxu0 0.0
        %195 = vmatprep.subr.mxu0 0.0
        %196 = vmatpush1.msra.mxu0 0.0
        %197 = vmatprep.subr.mxu0 0.0
        %198 = vmatpush1.msra.mxu0 0.0
        %199 = vmatprep.subr.mxu0 0.0
        %200 = vmatpush1.msra.mxu0 0.0
        %201 = vmatprep.subr.mxu0 0.0
        %202 = vmatpush1.msra.mxu0 0.0
        %203 = vmatprep.subr.mxu0 0.0
        %204 = vmatpush1.msra.mxu0 0.0
        %205 = vmatprep.subr.mxu0 0.0
        %206 = vmatpush1.msra.mxu0 0.0
        %207 = vmatprep.subr.mxu0 0.0
        %208 = vmatpush1.msra.mxu0 0.0
        %209 = vmatprep.subr.mxu0 0.0
        %210 = vmatpush1.msra.mxu0 0.0
        %211 = vmatprep.subr.mxu0 0.0
        %212 = vmatpush1.msra.mxu0 0.0
        %213 = vmatprep.subr.mxu0 0.0
        %214 = vmatpush1.msra.mxu0 0.0
        %215 = vmatprep.subr.mxu0 0.0
        %216 = vmatpush1.msra.mxu0 0.0
        %217 = vmatprep.subr.mxu0 0.0
        %218 = vmatpush1.msra.mxu0 0.0
        %219 = vmatprep.subr.mxu0 0.0
        %220 = vmatpush1.msra.mxu0 0.0
        %221 = vmatprep.subr.mxu0 0.0
        %222 = vmatpush1.msra.mxu0 0.0
        %223 = vmatprep.subr.mxu0 0.0
        %224 = vmatpush1.msra.mxu0 0.0
        %225 = vmatprep.subr.mxu0 0.0
        %226 = vmatpush1.msra.mxu0 0.0
        %227 = vmatprep.subr.mxu0 0.0
        %228 = vmatpush1.msra.mxu0 0.0
        %229 = vmatprep.subr.mxu0 0.0
        %230 = vmatpush1.msra.mxu0 0.0
        %231 = vmatprep.subr.mxu0 0.0
        %232 = vmatpush1.msra.mxu0 0.0
        %233 = vmatprep.subr.mxu0 0.0
        %234 = vmatpush1.msra.mxu0 0.0
        %235 = vmatprep.subr.mxu0 0.0
        %236 = vmatpush1.msra.mxu0 0.0
        %237 = vmatprep.mubr.f32.mxu0 0.0
        %238 = vmatmul.mubr.f32.gmra.mrb[0].mxu0 %v171
        %v239 = vpop.f32.mrb[0].mxu0
        %v240 = vadd.f32 0.0, %v239
        %v241 = vpop.f32.mrb[0].mxu0
        %v242 = vadd.f32 0.0, %v241
        %243 = vdwg.mxu0
        %244 = vmatprep.subr.mxu0 %v163
        %245 = vmatpush1.msra.mxu0 %v162
        %246 = vmatprep.subr.mxu0 0.0
        %247 = vmatpush1.msra.mxu0 0.0
        %248 = vmatprep.subr.mxu0 0.0
        %249 = vmatpush1.msra.mxu0 0.0
        %250 = vmatprep.subr.mxu0 0.0
        %251 = vmatpush1.msra.mxu0 0.0
        %252 = vmatprep.subr.mxu0 0.0
        %253 = vmatpush1.msra.mxu0 0.0
        %254 = vmatprep.subr.mxu0 0.0
        %255 = vmatpush1.msra.mxu0 0.0
        %256 = vmatprep.subr.mxu0 0.0
        %257 = vmatpush1.msra.mxu0 0.0
        %258 = vmatprep.subr.mxu0 0.0
        %259 = vmatpush1.msra.mxu0 0.0
        %260 = vmatprep.subr.mxu0 0.0
        %261 = vmatpush1.msra.mxu0 0.0
        %262 = vmatprep.subr.mxu0 0.0
        %263 = vmatpush1.msra.mxu0 0.0
        %264 = vmatprep.subr.mxu0 0.0
        %265 = vmatpush1.msra.mxu0 0.0
        %266 = vmatprep.subr.mxu0 0.0
        %267 = vmatpush1.msra.mxu0 0.0
        %268 = vmatprep.subr.mxu0 0.0
        %269 = vmatpush1.msra.mxu0 0.0
        %270 = vmatprep.subr.mxu0 0.0
        %271 = vmatpush1.msra.mxu0 0.0
        %272 = vmatprep.subr.mxu0 0.0
        %273 = vmatpush1.msra.mxu0 0.0
        %274 = vmatprep.subr.mxu0 0.0
        %275 = vmatpush1.msra.mxu0 0.0
        %276 = vmatprep.subr.mxu0 0.0
        %277 = vmatpush1.msra.mxu0 0.0
        %278 = vmatprep.subr.mxu0 0.0
        %279 = vmatpush1.msra.mxu0 0.0
        %280 = vmatprep.subr.mxu0 0.0
        %281 = vmatpush1.msra.mxu0 0.0
        %282 = vmatprep.subr.mxu0 0.0
        %283 = vmatpush1.msra.mxu0 0.0
        %284 = vmatprep.subr.mxu0 0.0
        %285 = vmatpush1.msra.mxu0 0.0
        %286 = vmatprep.subr.mxu0 0.0
        %287 = vmatpush1.msra.mxu0 0.0
        %288 = vmatprep.subr.mxu0 0.0
        %289 = vmatpush1.msra.mxu0 0.0
        %290 = vmatprep.subr.mxu0 0.0
        %291 = vmatpush1.msra.mxu0 0.0
        %292 = vmatprep.subr.mxu0 0.0
        %293 = vmatpush1.msra.mxu0 0.0
        %294 = vmatprep.subr.mxu0 0.0
        %295 = vmatpush1.msra.mxu0 0.0
        %296 = vmatprep.subr.mxu0 0.0
        %297 = vmatpush1.msra.mxu0 0.0
        %298 = vmatprep.subr.mxu0 0.0
        %299 = vmatpush1.msra.mxu0 0.0
        %300 = vmatprep.subr.mxu0 0.0
        %301 = vmatpush1.msra.mxu0 0.0
        %302 = vmatprep.subr.mxu0 0.0
        %303 = vmatpush1.msra.mxu0 0.0
        %304 = vmatprep.subr.mxu0 0.0
        %305 = vmatpush1.msra.mxu0 0.0
        %306 = vmatprep.subr.mxu0 0.0
        %307 = vmatpush1.msra.mxu0 0.0
        %308 = vmatprep.mubr.f32.mxu0 0.0
        %309 = vmatmul.mubr.f32.gmra.mrb[0].mxu0 %v171
        %v310 = vpop.f32.mrb[0].mxu0
        %v311 = vadd.f32 0.0, %v310
        %v312 = vpop.f32.mrb[0].mxu0
        %v313 = vadd.f32 0.0, %v312
        %314 = vdwg.mxu0
        %315 = vmatprep.subr.mxu0 %v165
        %316 = vmatpush1.msra.mxu0 %v164
        %317 = vmatprep.subr.mxu0 0.0
        %318 = vmatpush1.msra.mxu0 0.0
        %319 = vmatprep.subr.mxu0 0.0
        %320 = vmatpush1.msra.mxu0 0.0
        %321 = vmatprep.subr.mxu0 0.0
        %322 = vmatpush1.msra.mxu0 0.0
        %323 = vmatprep.subr.mxu0 0.0
        %324 = vmatpush1.msra.mxu0 0.0
        %325 = vmatprep.subr.mxu0 0.0
        %326 = vmatpush1.msra.mxu0 0.0
        %327 = vmatprep.subr.mxu0 0.0
        %328 = vmatpush1.msra.mxu0 0.0
        %329 = vmatprep.subr.mxu0 0.0
        %330 = vmatpush1.msra.mxu0 0.0
        %331 = vmatprep.subr.mxu0 0.0
        %332 = vmatpush1.msra.mxu0 0.0
        %333 = vmatprep.subr.mxu0 0.0
        %334 = vmatpush1.msra.mxu0 0.0
        %335 = vmatprep.subr.mxu0 0.0
        %336 = vmatpush1.msra.mxu0 0.0
        %337 = vmatprep.subr.mxu0 0.0
        %338 = vmatpush1.msra.mxu0 0.0
        %339 = vmatprep.subr.mxu0 0.0
        %340 = vmatpush1.msra.mxu0 0.0
        %341 = vmatprep.subr.mxu0 0.0
        %342 = vmatpush1.msra.mxu0 0.0
        %343 = vmatprep.subr.mxu0 0.0
        %344 = vmatpush1.msra.mxu0 0.0
        %345 = vmatprep.subr.mxu0 0.0
        %346 = vmatpush1.msra.mxu0 0.0
        %347 = vmatprep.subr.mxu0 0.0
        %348 = vmatpush1.msra.mxu0 0.0
        %349 = vmatprep.subr.mxu0 0.0
        %350 = vmatpush1.msra.mxu0 0.0
        %351 = vmatprep.subr.mxu0 0.0
        %352 = vmatpush1.msra.mxu0 0.0
        %353 = vmatprep.subr.mxu0 0.0
        %354 = vmatpush1.msra.mxu0 0.0
        %355 = vmatprep.subr.mxu0 0.0
        %356 = vmatpush1.msra.mxu0 0.0
        %357 = vmatprep.subr.mxu0 0.0
        %358 = vmatpush1.msra.mxu0 0.0
        %359 = vmatprep.subr.mxu0 0.0
        %360 = vmatpush1.msra.mxu0 0.0
        %361 = vmatprep.subr.mxu0 0.0
        %362 = vmatpush1.msra.mxu0 0.0
        %363 = vmatprep.subr.mxu0 0.0
        %364 = vmatpush1.msra.mxu0 0.0
        %365 = vmatprep.subr.mxu0 0.0
        %366 = vmatpush1.msra.mxu0 0.0
        %367 = vmatprep.subr.mxu0 0.0
        %368 = vmatpush1.msra.mxu0 0.0
        %369 = vmatprep.subr.mxu0 0.0
        %370 = vmatpush1.msra.mxu0 0.0
        %371 = vmatprep.subr.mxu0 0.0
        %372 = vmatpush1.msra.mxu0 0.0
        %373 = vmatprep.subr.mxu0 0.0
        %374 = vmatpush1.msra.mxu0 0.0
        %375 = vmatprep.subr.mxu0 0.0
        %376 = vmatpush1.msra.mxu0 0.0
        %377 = vmatprep.subr.mxu0 0.0
        %378 = vmatpush1.msra.mxu0 0.0
        %379 = vmatprep.mubr.f32.mxu0 0.0
        %380 = vmatmul.mubr.f32.gmra.mrb[0].mxu0 %v171
        %v381 = vpop.f32.mrb[0].mxu0
        %v382 = vadd.f32 0.0, %v381
        %v383 = vpop.f32.mrb[0].mxu0
        %v384 = vadd.f32 0.0, %v383
        %385 = vdwg.mxu0
        %386 = vmatprep.subr.mxu0 %v167
        %387 = vmatpush1.msra.mxu0 %v166
        %388 = vmatprep.subr.mxu0 0.0
        %389 = vmatpush1.msra.mxu0 0.0
        %390 = vmatprep.subr.mxu0 0.0
        %391 = vmatpush1.msra.mxu0 0.0
        %392 = vmatprep.subr.mxu0 0.0
        %393 = vmatpush1.msra.mxu0 0.0
        %394 = vmatprep.subr.mxu0 0.0
        %395 = vmatpush1.msra.mxu0 0.0
        %396 = vmatprep.subr.mxu0 0.0
        %397 = vmatpush1.msra.mxu0 0.0
        %398 = vmatprep.subr.mxu0 0.0
        %399 = vmatpush1.msra.mxu0 0.0
        %400 = vmatprep.subr.mxu0 0.0
        %401 = vmatpush1.msra.mxu0 0.0
        %402 = vmatprep.subr.mxu0 0.0
        %403 = vmatpush1.msra.mxu0 0.0
        %404 = vmatprep.subr.mxu0 0.0
        %405 = vmatpush1.msra.mxu0 0.0
        %406 = vmatprep.subr.mxu0 0.0
        %407 = vmatpush1.msra.mxu0 0.0
        %408 = vmatprep.subr.mxu0 0.0
        %409 = vmatpush1.msra.mxu0 0.0
        %410 = vmatprep.subr.mxu0 0.0
        %411 = vmatpush1.msra.mxu0 0.0
        %412 = vmatprep.subr.mxu0 0.0
        %413 = vmatpush1.msra.mxu0 0.0
        %414 = vmatprep.subr.mxu0 0.0
        %415 = vmatpush1.msra.mxu0 0.0
        %416 = vmatprep.subr.mxu0 0.0
        %417 = vmatpush1.msra.mxu0 0.0
        %418 = vmatprep.subr.mxu0 0.0
        %419 = vmatpush1.msra.mxu0 0.0
        %420 = vmatprep.subr.mxu0 0.0
        %421 = vmatpush1.msra.mxu0 0.0
        %422 = vmatprep.subr.mxu0 0.0
        %423 = vmatpush1.msra.mxu0 0.0
        %424 = vmatprep.subr.mxu0 0.0
        %425 = vmatpush1.msra.mxu0 0.0
        %426 = vmatprep.subr.mxu0 0.0
        %427 = vmatpush1.msra.mxu0 0.0
        %428 = vmatprep.subr.mxu0 0.0
        %429 = vmatpush1.msra.mxu0 0.0
        %430 = vmatprep.subr.mxu0 0.0
        %431 = vmatpush1.msra.mxu0 0.0
        %432 = vmatprep.subr.mxu0 0.0
        %433 = vmatpush1.msra.mxu0 0.0
        %434 = vmatprep.subr.mxu0 0.0
        %435 = vmatpush1.msra.mxu0 0.0
        %436 = vmatprep.subr.mxu0 0.0
        %437 = vmatpush1.msra.mxu0 0.0
        %438 = vmatprep.subr.mxu0 0.0
        %439 = vmatpush1.msra.mxu0 0.0
        %440 = vmatprep.subr.mxu0 0.0
        %441 = vmatpush1.msra.mxu0 0.0
        %442 = vmatprep.subr.mxu0 0.0
        %443 = vmatpush1.msra.mxu0 0.0
        %444 = vmatprep.subr.mxu0 0.0
        %445 = vmatpush1.msra.mxu0 0.0
        %446 = vmatprep.subr.mxu0 0.0
        %447 = vmatpush1.msra.mxu0 0.0
        %448 = vmatprep.subr.mxu0 0.0
        %449 = vmatpush1.msra.mxu0 0.0
        %450 = vmatprep.mubr.f32.mxu0 0.0
        %451 = vmatmul.mubr.f32.gmra.mrb[0].mxu0 %v171
        %v452 = vpop.f32.mrb[0].mxu0
        %v453 = vadd.f32 0.0, %v452
        %v454 = vpop.f32.mrb[0].mxu0
        %v455 = vadd.f32 0.0, %v454
        %456 = vdwg.mxu0
        %v457 = vrot.slane %v240, 4
        %v458 = vmax.f32 %v240, %v457
        %v459 = vrot.slane %v458, 2
        %v460 = vmax.f32 %v458, %v459
        %v461 = vrot.slane %v460, 1
        %v462 = vmax.f32 %v460, %v461
        %v463 = vrot.slane %v242, 4
        %v464 = vmax.f32 %v242, %v463
        %v465 = vrot.slane %v464, 2
        %v466 = vmax.f32 %v464, %v465
        %v467 = vrot.slane %v466, 1
        %v468 = vmax.f32 %v466, %v467
        %v469 = vrot.slane %v311, 4
        %v470 = vmax.f32 %v311, %v469
        %v471 = vrot.slane %v470, 2
        %v472 = vmax.f32 %v470, %v471
        %v473 = vrot.slane %v472, 1
        %v474 = vmax.f32 %v472, %v473
        %v475 = vrot.slane %v313, 4
        %v476 = vmax.f32 %v313, %v475
        %v477 = vrot.slane %v476, 2
        %v478 = vmax.f32 %v476, %v477
        %v479 = vrot.slane %v478, 1
        %v480 = vmax.f32 %v478, %v479
        %v481 = vrot.slane %v382, 4
        %v482 = vmax.f32 %v382, %v481
        %v483 = vrot.slane %v482, 2
        %v484 = vmax.f32 %v482, %v483
        %v485 = vrot.slane %v484, 1
        %v486 = vmax.f32 %v484, %v485
        %v487 = vrot.slane %v384, 4
        %v488 = vmax.f32 %v384, %v487
        %v489 = vrot.slane %v488, 2
        %v490 = vmax.f32 %v488, %v489
        %v491 = vrot.slane %v490, 1
        %v492 = vmax.f32 %v490, %v491
        %v493 = vrot.slane %v453, 4
        %v494 = vmax.f32 %v453, %v493
        %v495 = vrot.slane %v494, 2
        %v496 = vmax.f32 %v494, %v495
        %v497 = vrot.slane %v496, 1
        %v498 = vmax.f32 %v496, %v497
        %v499 = vrot.slane %v455, 4
        %v500 = vmax.f32 %v455, %v499
        %v501 = vrot.slane %v500, 2
        %v502 = vmax.f32 %v500, %v501
        %v503 = vrot.slane %v502, 1
        %v504 = vmax.f32 %v502, %v503
        %v505 = vsub.f32 %v240, %v462
        %v506 = vsub.f32 %v242, %v468
        %v507 = vsub.f32 %v311, %v474
        %v508 = vsub.f32 %v313, %v480
        %v509 = vsub.f32 %v382, %v486
        %v510 = vsub.f32 %v384, %v492
        %v511 = vsub.f32 %v453, %v498
        %v512 = vsub.f32 %v455, %v504
        %v513 = vmul.f32 %v505, 1.442695
        %v514 = vpow.pop %v513
        %v515 = vmul.f32 %v506, 1.442695
        %v516 = vpow.pop %v515
        %v517 = vmul.f32 %v507, 1.442695
        %v518 = vpow.pop %v517
        %v519 = vmul.f32 %v508, 1.442695
        %v520 = vpow.pop %v519
        %v521 = vmul.f32 %v509, 1.442695
        %v522 = vpow.pop %v521
        %v523 = vmul.f32 %v510, 1.442695
        %v524 = vpow.pop %v523
        %v525 = vmul.f32 %v511, 1.442695
        %v526 = vpow.pop %v525
        %v527 = vmul.f32 %v512, 1.442695
        %v528 = vpow.pop %v527
        %v529 = vrot.slane %v514, 4
        %v530 = vadd.f32 %v514, %v529
        %v531 = vrot.slane %v530, 2
        %v532 = vadd.f32 %v530, %v531
        %v533 = vrot.slane %v532, 1
        %v534 = vadd.f32 %v532, %v533
        %v535 = vrot.slane %v516, 4
        %v536 = vadd.f32 %v516, %v535
        %v537 = vrot.slane %v536, 2
        %v538 = vadd.f32 %v536, %v537
        %v539 = vrot.slane %v538, 1
        %v540 = vadd.f32 %v538, %v539
        %v541 = vrot.slane %v518, 4
        %v542 = vadd.f32 %v518, %v541
        %v543 = vrot.slane %v542, 2
        %v544 = vadd.f32 %v542, %v543
        %v545 = vrot.slane %v544, 1
        %v546 = vadd.f32 %v544, %v545
        %v547 = vrot.slane %v520, 4
        %v548 = vadd.f32 %v520, %v547
        %v549 = vrot.slane %v548, 2
        %v550 = vadd.f32 %v548, %v549
        %v551 = vrot.slane %v550, 1
        %v552 = vadd.f32 %v550, %v551
        %v553 = vrot.slane %v522, 4
        %v554 = vadd.f32 %v522, %v553
        %v555 = vrot.slane %v554, 2
        %v556 = vadd.f32 %v554, %v555
        %v557 = vrot.slane %v556, 1
        %v558 = vadd.f32 %v556, %v557
        %v559 = vrot.slane %v524, 4
        %v560 = vadd.f32 %v524, %v559
        %v561 = vrot.slane %v560, 2
        %v562 = vadd.f32 %v560, %v561
        %v563 = vrot.slane %v562, 1
        %v564 = vadd.f32 %v562, %v563
        %v565 = vrot.slane %v526, 4
        %v566 = vadd.f32 %v526, %v565
        %v567 = vrot.slane %v566, 2
        %v568 = vadd.f32 %v566, %v567
        %v569 = vrot.slane %v568, 1
        %v570 = vadd.f32 %v568, %v569
        %v571 = vrot.slane %v528, 4
        %v572 = vadd.f32 %v528, %v571
        %v573 = vrot.slane %v572, 2
        %v574 = vadd.f32 %v572, %v573
        %v575 = vrot.slane %v574, 1
        %v576 = vadd.f32 %v574, %v575
        %v577 = vrcp.pop %v534
        %v578 = vmul.f32 %v514, %v577
        %v579 = vrcp.pop %v540
        %v580 = vmul.f32 %v516, %v579
        %v581 = vrcp.pop %v546
        %v582 = vmul.f32 %v518, %v581
        %v583 = vrcp.pop %v552
        %v584 = vmul.f32 %v520, %v583
        %v585 = vrcp.pop %v558
        %v586 = vmul.f32 %v522, %v585
        %v587 = vrcp.pop %v564
        %v588 = vmul.f32 %v524, %v587
        %v589 = vrcp.pop %v570
        %v590 = vmul.f32 %v526, %v589
        %v591 = vrcp.pop %v576
        %v592 = vmul.f32 %v528, %v591
        %v593 = vmul.f32 %v578, %v160
        %v594 = vmul.f32 %v580, %v161
        %v595 = vmul.f32 %v582, %v162
        %v596 = vmul.f32 %v584, %v163
        %v597 = vmul.f32 %v586, %v164
        %v598 = vmul.f32 %v588, %v165
        %v599 = vmul.f32 %v590, %v166
        %v600 = vmul.f32 %v592, %v167
        %601 = vst [vmem:[%s158] sm:$0xff] %v593
        %602 = vst [vmem:[%s158 + $0x8] sm:$0xff] %v594
        %603 = vst [vmem:[%s158 + $0x10] sm:$0xff] %v595
        %604 = vst [vmem:[%s158 + $0x18] sm:$0xff] %v596
        %605 = vst [vmem:[%s158 + $0x20] sm:$0xff] %v597
        %606 = vst [vmem:[%s158 + $0x28] sm:$0xff] %v598
        %607 = vst [vmem:[%s158 + $0x30] sm:$0xff] %v599
        %608 = vst [vmem:[%s158 + $0x38] sm:$0xff] %v600
        %s609 = smul.u32 8, %s14
        %p610 = scmp.lt.s32.totalorder %s609, 15
        %s611 = scalar_select %p610, %s609, 15
        %s612 = smul.addr %s611, 8
        %s613 = scalar_lea.vmem %s2, %s612
        // Predicated region
        $region33: #{_lambda_.3} parent=27 // pred_check
          %p614 = pneg %p79
        $region34: #{_lambda_.3} parent=27 // pred_check_branch
          %616 = sbr.rel (%p614) target = $region36
        $region35: #{_lambda_.3} parent=27 // pred_region
          %s617 = smul.u32 8, %s14
        $region36: #{_lambda_.3} parent=27 // pred_fallthru
          _
      $region28: #{_lambda_.3} parent=5 // pred_fallthru
        _
      %p618 = scmp.le.s32.totalorder 2, %s9
      // Predicated region
      $region37: #{_lambda_.3} parent=5 // pred_check
        %p619 = pneg %p618
      $region38: #{_lambda_.3} parent=5 // pred_check_branch
        %621 = sbr.rel (%p619) target = $region40
      $region39: #{_lambda_.3} parent=5 // pred_region
        %s622 = ssub.s32 %s9, 2
        // Predicated region
        $region41: #{_lambda_.3} parent=39 // pred_check
          %p623 = pneg %p85
        $region42: #{_lambda_.3} parent=39 // pred_check_branch
          %625 = sbr.rel (%p623) target = $region44
        $region43: #{_lambda_.3} parent=39 // pred_region
          %s626 = smul.u32 8, %s15
          %p627 = scmp.lt.s32.totalorder %s626, 15
          %s628 = scalar_select %p627, %s626, 15
          %s629 = smul.addr %s628, 8
          %s630 = scalar_lea.vmem %s2, %s629
        $region44: #{_lambda_.3} parent=39 // pred_fallthru
          _
      $region40: #{_lambda_.3} parent=5 // pred_fallthru
        _
    $region6: #{_lambda_.3} parent=1 // loop_footer
      %s13 = sadd.s32 1, %s9
    $region7: #{_lambda_.3} parent=1 // loop_footer_branch
      %8 = sbr.rel target = $region3
    $region8: #{_lambda_.3} parent=1 // loop_exit
      _
    %631 = vsyncpa [#allocation3], 1
    %s632 = scalar_lea.sflag [#allocation3], 1
    %633 = vsyncpa %s632, 1

// kernel: _lambda_.4
$region0: #{_lambda_.4}
  #allocation0 [shape = 'u32[]', space=smem, size = 0x4, offset = 0x4, fixed_abs, tag = 'smem constant byte address 0x4 - core index']
  #allocation1 [shape = 'u32[144,128]{1,0:T(1,128)}', space=vmem, size = 0x12000, scoped, tag = 'internal scratch']
  %s0 = inlined_call_operand.vmem [shape: f32[8,2000], index: 0, kind: input, shape index: {}]
  %s1 = inlined_call_operand.vmem [shape: f32[16,8], index: 1, kind: input, shape index: {}]
  %s2 = inlined_call_operand.vmem [shape: f32[2,16,1], index: 2, kind: output, shape index: {0}]
  %s3 = inlined_call_operand.vmem [shape: f32[2,16,1], index: 3, kind: output, shape index: {1}]
  %4 = xla_tuple %s2, %s3
  %s5 = sld [smem:[#allocation0]]
  $region49: #{_lambda_.4} parent=0
    _
  %s7 = ssub.s32 1, %s5
  %s8 = scalar_select 0, %s7, %s5
  loop: start=0, step=1, limit=4
  $region2: #{_lambda_.4} parent=0 // loop_pre_header
    _
  $region3: #{_lambda_.4} parent=0 // loop_header
    %s10 = sphi 0, %s14
    %p11 = scmp.ge.s32.totalorder %s10, 4
    %s20 = sphi 0, %s22
    %s23 = sphi 0, %s20
    %s24 = sphi 0, %s23
    %s40 = sphi 0, %s24
    %s44 = sphi 0, %s44
    %s46 = sphi 0, %s44
    %s47 = sphi 0, %s46
    %s61 = sphi 0, %s47
    %s67 = sphi 0, %s69
    %s70 = sphi 0, %s67
    %s71 = sphi 0, %s70
    %s87 = sphi 0, %s71
    %s93 = sphi 0, %s95
    %s96 = sphi 0, %s93
    %s97 = sphi 0, %s96
    %s113 = sphi 0, %s97
  $region4: #{_lambda_.4} parent=0 // loop_header_branch
    %13 = sbr.rel (%p11) target = $region8
  $region5: #{_lambda_.4} parent=0 // loop_body
    %s15 = ssub.s32 %s10, 1
    %s16 = ssub.s32 %s10, 2
    %s17 = sadd.s32 %s10, 1
    %s18 = ssub.s32 %s10, %s17
    %p19 = scmp.eq.s32.totalorder %s18, 0
    %s21 = sadd.s32 %s20, 1
    %s22 = scalar_select %p19, %s20, %s21
    %p25 = pneg %p19
    %p26 = scmp.eq.s32.totalorder %s10, 1
    %p27 = por %p25, %p26
    %p28 = scmp.ne.s32.totalorder %s20, %s23
    %p29 = scmp.eq.s32.totalorder %s10, 0
    %p30 = por %p28, %p29
    %p31 = scmp.ne.s32.totalorder %s20, %s23
    %p32 = scmp.eq.s32.totalorder %s15, 1
    %p33 = por %p31, %p32
    %p34 = scmp.ne.s32.totalorder %s23, %s24
    %p35 = scmp.eq.s32.totalorder %s15, 0
    %p36 = por %p34, %p35
    %p37 = scmp.ne.s32.totalorder %s23, %s24
    %p38 = scmp.eq.s32.totalorder %s16, 1
    %p39 = por %p37, %p38
    %p41 = scmp.ne.s32.totalorder %s24, %s40
    %p42 = scmp.eq.s32.totalorder %s16, 0
    %p43 = por %p41, %p42
    %s45 = sadd.s32 %s44, 1
    %p48 = scmp.eq.s32.totalorder %s10, 1
    %p49 = scmp.ne.s32.totalorder %s44, %s46
    %p50 = scmp.eq.s32.totalorder %s10, 0
    %p51 = por %p49, %p50
    %p52 = scmp.ne.s32.totalorder %s44, %s46
    %p53 = scmp.eq.s32.totalorder %s15, 1
    %p54 = por %p52, %p53
    %p55 = scmp.ne.s32.totalorder %s46, %s47
    %p56 = scmp.eq.s32.totalorder %s15, 0
    %p57 = por %p55, %p56
    %p58 = scmp.ne.s32.totalorder %s46, %s47
    %p59 = scmp.eq.s32.totalorder %s16, 1
    %p60 = por %p58, %p59
    %p62 = scmp.ne.s32.totalorder %s47, %s61
    %p63 = scmp.eq.s32.totalorder %s16, 0
    %p64 = por %p62, %p63
    %s65 = ssub.s32 %s10, %s17
    %p66 = scmp.eq.s32.totalorder %s65, 0
    %s68 = sadd.s32 %s67, 1
    %s69 = scalar_select %p66, %s67, %s68
    %p72 = pneg %p66
    %p73 = scmp.eq.s32.totalorder %s10, 1
    %p74 = por %p72, %p73
    %p75 = scmp.ne.s32.totalorder %s67, %s70
    %p76 = scmp.eq.s32.totalorder %s10, 0
    %p77 = por %p75, %p76
    %p78 = scmp.ne.s32.totalorder %s67, %s70
    %p79 = scmp.eq.s32.totalorder %s15, 1
    %p80 = por %p78, %p79
    %p81 = scmp.ne.s32.totalorder %s70, %s71
    %p82 = scmp.eq.s32.totalorder %s15, 0
    %p83 = por %p81, %p82
    %p84 = scmp.ne.s32.totalorder %s70, %s71
    %p85 = scmp.eq.s32.totalorder %s16, 1
    %p86 = por %p84, %p85
    %p88 = scmp.ne.s32.totalorder %s71, %s87
    %p89 = scmp.eq.s32.totalorder %s16, 0
    %p90 = por %p88, %p89
    %s91 = ssub.s32 %s10, %s17
    %p92 = scmp.eq.s32.totalorder %s91, 0
    %s94 = sadd.s32 %s93, 1
    %s95 = scalar_select %p92, %s93, %s94
    %p98 = pneg %p92
    %p99 = scmp.eq.s32.totalorder %s10, 1
    %p100 = por %p98, %p99
    %p101 = scmp.ne.s32.totalorder %s93, %s96
    %p102 = scmp.eq.s32.totalorder %s10, 0
    %p103 = por %p101, %p102
    %p104 = scmp.ne.s32.totalorder %s93, %s96
    %p105 = scmp.eq.s32.totalorder %s15, 1
    %p106 = por %p104, %p105
    %p107 = scmp.ne.s32.totalorder %s96, %s97
    %p108 = scmp.eq.s32.totalorder %s15, 0
    %p109 = por %p107, %p108
    %p110 = scmp.ne.s32.totalorder %s96, %s97
    %p111 = scmp.eq.s32.totalorder %s16, 1
    %p112 = por %p110, %p111
    %p114 = scmp.ne.s32.totalorder %s97, %s113
    %p115 = scmp.eq.s32.totalorder %s16, 0
    %p116 = por %p114, %p115
    %p117 = scmp.le.s32.totalorder 1, %s10
    %p118 = scmp.lt.s32.totalorder %s10, 3
    %p119 = pnand %p117, %p118
    %p120 = pneg %p119
    // Predicated region
    $region9: #{_lambda_.4} parent=5 // pred_check
      _
    $region10: #{_lambda_.4} parent=5 // pred_check_branch
      %122 = sbr.rel (%p119) target = $region12
    $region11: #{_lambda_.4} parent=5 // pred_region
      %s123 = ssub.s32 %s10, 1
      // Predicated region
      $region13: #{_lambda_.4} parent=11 // pred_check
        %p124 = pneg %p57
      $region14: #{_lambda_.4} parent=11 // pred_check_branch
        %126 = sbr.rel (%p124) target = $region16
      $region15: #{_lambda_.4} parent=11 // pred_region
        _
      $region16: #{_lambda_.4} parent=11 // pred_fallthru
        _
    $region12: #{_lambda_.4} parent=5 // pred_fallthru
      _
    %p127 = scmp.lt.s32.totalorder %s10, 2
    // Predicated region
    $region17: #{_lambda_.4} parent=5 // pred_check
      %p128 = pneg %p127
    $region18: #{_lambda_.4} parent=5 // pred_check_branch
      %130 = sbr.rel (%p128) target = $region20
    $region19: #{_lambda_.4} parent=5 // pred_region
      // Predicated region
      $region21: #{_lambda_.4} parent=19 // pred_check
        %p131 = pneg %p30
      $region22: #{_lambda_.4} parent=19 // pred_check_branch
        %133 = sbr.rel (%p131) target = $region24
      $region23: #{_lambda_.4} parent=19 // pred_region
        %s134 = smul.u32 8, %s10
        %p135 = scmp.lt.s32.totalorder %s134, 15
        %s136 = scalar_select %p135, %s134, 15
        %s137 = smul.addr %s136, 8
        %s138 = scalar_lea.vmem %s0, %s137
        %s139 = smul.u32 8, %s10
      $region24: #{_lambda_.4} parent=19 // pred_fallthru
        _
    $region20: #{_lambda_.4} parent=5 // pred_fallthru
      _
    %p140 = scmp.le.s32.totalorder 1, %s10
    %p141 = scmp.lt.s32.totalorder %s10, 3
    %p142 = pnand %p140, %p141
    %p143 = pneg %p142
    // Predicated region
    $region25: #{_lambda_.4} parent=5 // pred_check
      _
    $region26: #{_lambda_.4} parent=5 // pred_check_branch
      %145 = sbr.rel (%p142) target = $region28
    $region27: #{_lambda_.4} parent=5 // pred_region
      %s146 = ssub.s32 %s10, 1
      %s147 = smul.u32 8, %s15
      %p148 = scmp.lt.s32.totalorder %s147, 15
      %s149 = scalar_select %p148, %s147, 15
      %s150 = smul.addr %s149, 8
      %s151 = scalar_lea.vmem %s0, %s150
      %p152 = pneg %p36
      %p153 = pneg %p33
      %p154 = pneg %p57
      %p155 = pneg %p54
      %p156 = pneg %p83
      %p157 = pneg %p80
      %p158 = scmp.lt.s32.totalorder %s15, 1
      %s159 = scalar_select %p158, %s15, 1
      %s160 = smul.addr %s159, 2
      %s161 = smul.addr %s160, 8
      %s162 = scalar_lea.vmem %s2, %s161
      %p163 = pneg %p109
      %p164 = pneg %p106
      %p165 = scmp.lt.s32.totalorder %s15, 1
      %s166 = scalar_select %p165, %s15, 1
      %s167 = smul.addr %s166, 2
      %s168 = smul.addr %s167, 8
      %s169 = scalar_lea.vmem %s3, %s168
      %s170 = smul.u32 8, %s15
      %p171 = scmp.lt.s32.totalorder %s170, 15
      %s172 = scalar_select %p171, %s170, 15
      %s173 = smul.addr %s172, 8
      %s174 = scalar_lea.vmem %s0, %s173
      %s175 = smul.u32 8, %s15
      %p176 = scmp.lt.s32.totalorder %s15, 1
      %s177 = scalar_select %p176, %s15, 1
      %s178 = smul.addr %s177, 2
      %s179 = smul.addr %s178, 8
      %s180 = scalar_lea.vmem %s2, %s179
      %p181 = scmp.lt.s32.totalorder %s15, 1
      %s182 = scalar_select %p181, %s15, 1
      %s183 = smul.addr %s182, 2
      %s184 = smul.addr %s183, 8
      %s185 = scalar_lea.vmem %s3, %s184
      %v186 = vld [vmem:[%s174] sm:$0xff]
      %v187 = vld [vmem:[%s174 + $0x8] sm:$0xff]
      %v188 = vld [vmem:[%s174 + $0x10] sm:$0xff]
      %v189 = vld [vmem:[%s174 + $0x18] sm:$0xff]
      %v190 = vld [vmem:[%s174 + $0x20] sm:$0xff]
      %v191 = vld [vmem:[%s174 + $0x28] sm:$0xff]
      %v192 = vld [vmem:[%s174 + $0x30] sm:$0xff]
      %v193 = vld [vmem:[%s174 + $0x38] sm:$0xff]
      %v194 = vld [vmem:[%s1] sm:$0xff]
      %v195 = vld [vmem:[%s1 + $0x8] sm:$0xff]
      %vm196 = vcmask 64512
      %v198 = vsel %vm196, %v194, 0
      %v201 = vsel %vm196, %v195, 0
      %203 = vmatprep.subr.mxu0 %v187
      %204 = vmatpush1.msra.mxu0 %v186
      %205 = vmatprep.subr.mxu0 0.0
      %206 = vmatpush1.msra.mxu0 0.0
      %207 = vmatprep.subr.mxu0 0.0
      %208 = vmatpush1.msra.mxu0 0.0
      %209 = vmatprep.subr.mxu0 0.0
      %210 = vmatpush1.msra.mxu0 0.0
      %211 = vmatprep.subr.mxu0 0.0
      %212 = vmatpush1.msra.mxu0 0.0
      %213 = vmatprep.subr.mxu0 0.0
      %214 = vmatpush1.msra.mxu0 0.0
      %215 = vmatprep.subr.mxu0 0.0
      %216 = vmatpush1.msra.mxu0 0.0
      %217 = vmatprep.subr.mxu0 0.0
      %218 = vmatpush1.msra.mxu0 0.0
      %219 = vmatprep.subr.mxu0 0.0
      %220 = vmatpush1.msra.mxu0 0.0
      %221 = vmatprep.subr.mxu0 0.0
      %222 = vmatpush1.msra.mxu0 0.0
      %223 = vmatprep.subr.mxu0 0.0
      %224 = vmatpush1.msra.mxu0 0.0
      %225 = vmatprep.subr.mxu0 0.0
      %226 = vmatpush1.msra.mxu0 0.0
      %227 = vmatprep.subr.mxu0 0.0
      %228 = vmatpush1.msra.mxu0 0.0
      %229 = vmatprep.subr.mxu0 0.0
      %230 = vmatpush1.msra.mxu0 0.0
      %231 = vmatprep.subr.mxu0 0.0
      %232 = vmatpush1.msra.mxu0 0.0
      %233 = vmatprep.subr.mxu0 0.0
      %234 = vmatpush1.msra.mxu0 0.0
      %235 = vmatprep.subr.mxu0 0.0
      %236 = vmatpush1.msra.mxu0 0.0
      %237 = vmatprep.subr.mxu0 0.0
      %238 = vmatpush1.msra.mxu0 0.0
      %239 = vmatprep.subr.mxu0 0.0
      %240 = vmatpush1.msra.mxu0 0.0
      %241 = vmatprep.subr.mxu0 0.0
      %242 = vmatpush1.msra.mxu0 0.0
      %243 = vmatprep.subr.mxu0 0.0
      %244 = vmatpush1.msra.mxu0 0.0
      %245 = vmatprep.subr.mxu0 0.0
      %246 = vmatpush1.msra.mxu0 0.0
      %247 = vmatprep.subr.mxu0 0.0
      %248 = vmatpush1.msra.mxu0 0.0
      %249 = vmatprep.subr.mxu0 0.0
      %250 = vmatpush1.msra.mxu0 0.0
      %251 = vmatprep.subr.mxu0 0.0
      %252 = vmatpush1.msra.mxu0 0.0
      %253 = vmatprep.subr.mxu0 0.0
      %254 = vmatpush1.msra.mxu0 0.0
      %255 = vmatprep.subr.mxu0 0.0
      %256 = vmatpush1.msra.mxu0 0.0
      %257 = vmatprep.subr.mxu0 0.0
      %258 = vmatpush1.msra.mxu0 0.0
      %259 = vmatprep.subr.mxu0 0.0
      %260 = vmatpush1.msra.mxu0 0.0
      %261 = vmatprep.subr.mxu0 0.0
      %262 = vmatpush1.msra.mxu0 0.0
      %263 = vmatprep.subr.mxu0 0.0
      %264 = vmatpush1.msra.mxu0 0.0
      %265 = vmatprep.subr.mxu0 0.0
      %266 = vmatpush1.msra.mxu0 0.0
      %267 = vmatprep.mubr.f32.mxu0 0.0
      %268 = vmatmul.mubr.f32.gmra.mrb[0].mxu0 %v198
      %v269 = vpop.f32.mrb[0].mxu0
      %v270 = vadd.f32 0.0, %v269
      %v271 = vpop.f32.mrb[0].mxu0
      %v272 = vadd.f32 0.0, %v271
      %273 = vmatprep.mubr.f32.mxu0 0.0
      %274 = vmatmul.mubr.f32.gmra.mrb[0].mxu0 %v201
      %v275 = vpop.f32.mrb[0].mxu0
      %v276 = vadd.f32 0.0, %v275
      %v277 = vpop.f32.mrb[0].mxu0
      %v278 = vadd.f32 0.0, %v277
      %279 = vdwg.mxu0
      %280 = vmatprep.subr.mxu0 %v189
      %281 = vmatpush1.msra.mxu0 %v188
      %282 = vmatprep.subr.mxu0 0.0
      %283 = vmatpush1.msra.mxu0 0.0
      %284 = vmatprep.subr.mxu0 0.0
      %285 = vmatpush1.msra.mxu0 0.0
      %286 = vmatprep.subr.mxu0 0.0
      %287 = vmatpush1.msra.mxu0 0.0
      %288 = vmatprep.subr.mxu0 0.0
      %289 = vmatpush1.msra.mxu0 0.0
      %290 = vmatprep.subr.mxu0 0.0
      %291 = vmatpush1.msra.mxu0 0.0
      %292 = vmatprep.subr.mxu0 0.0
      %293 = vmatpush1.msra.mxu0 0.0
      %294 = vmatprep.subr.mxu0 0.0
      %295 = vmatpush1.msra.mxu0 0.0
      %296 = vmatprep.subr.mxu0 0.0
      %297 = vmatpush1.msra.mxu0 0.0
      %298 = vmatprep.subr.mxu0 0.0
      %299 = vmatpush1.msra.mxu0 0.0
      %300 = vmatprep.subr.mxu0 0.0
      %301 = vmatpush1.msra.mxu0 0.0
      %302 = vmatprep.subr.mxu0 0.0
      %303 = vmatpush1.msra.mxu0 0.0
      %304 = vmatprep.subr.mxu0 0.0
      %305 = vmatpush1.msra.mxu0 0.0
      %306 = vmatprep.subr.mxu0 0.0
      %307 = vmatpush1.msra.mxu0 0.0
      %308 = vmatprep.subr.mxu0 0.0
      %309 = vmatpush1.msra.mxu0 0.0
      %310 = vmatprep.subr.mxu0 0.0
      %311 = vmatpush1.msra.mxu0 0.0
      %312 = vmatprep.subr.mxu0 0.0
      %313 = vmatpush1.msra.mxu0 0.0
      %314 = vmatprep.subr.mxu0 0.0
      %315 = vmatpush1.msra.mxu0 0.0
      %316 = vmatprep.subr.mxu0 0.0
      %317 = vmatpush1.msra.mxu0 0.0
      %318 = vmatprep.subr.mxu0 0.0
      %319 = vmatpush1.msra.mxu0 0.0
      %320 = vmatprep.subr.mxu0 0.0
      %321 = vmatpush1.msra.mxu0 0.0
      %322 = vmatprep.subr.mxu0 0.0
      %323 = vmatpush1.msra.mxu0 0.0
      %324 = vmatprep.subr.mxu0 0.0
      %325 = vmatpush1.msra.mxu0 0.0
      %326 = vmatprep.subr.mxu0 0.0
      %327 = vmatpush1.msra.mxu0 0.0
      %328 = vmatprep.subr.mxu0 0.0
      %329 = vmatpush1.msra.mxu0 0.0
      %330 = vmatprep.subr.mxu0 0.0
      %331 = vmatpush1.msra.mxu0 0.0
      %332 = vmatprep.subr.mxu0 0.0
      %333 = vmatpush1.msra.mxu0 0.0
      %334 = vmatprep.subr.mxu0 0.0
      %335 = vmatpush1.msra.mxu0 0.0
      %336 = vmatprep.subr.mxu0 0.0
      %337 = vmatpush1.msra.mxu0 0.0
      %338 = vmatprep.subr.mxu0 0.0
      %339 = vmatpush1.msra.mxu0 0.0
      %340 = vmatprep.subr.mxu0 0.0
      %341 = vmatpush1.msra.mxu0 0.0
      %342 = vmatprep.subr.mxu0 0.0
      %343 = vmatpush1.msra.mxu0 0.0
      %344 = vmatprep.mubr.f32.mxu0 0.0
      %345 = vmatmul.mubr.f32.gmra.mrb[0].mxu0 %v198
      %v346 = vpop.f32.mrb[0].mxu0
      %v347 = vadd.f32 0.0, %v346
      %v348 = vpop.f32.mrb[0].mxu0
      %v349 = vadd.f32 0.0, %v348
      %350 = vmatprep.mubr.f32.mxu0 0.0
      %351 = vmatmul.mubr.f32.gmra.mrb[0].mxu0 %v201
      %v352 = vpop.f32.mrb[0].mxu0
      %v353 = vadd.f32 0.0, %v352
      %v354 = vpop.f32.mrb[0].mxu0
      %v355 = vadd.f32 0.0, %v354
      %356 = vdwg.mxu0
      %357 = vmatprep.subr.mxu0 %v191
      %358 = vmatpush1.msra.mxu0 %v190
      %359 = vmatprep.subr.mxu0 0.0
      %360 = vmatpush1.msra.mxu0 0.0
      %361 = vmatprep.subr.mxu0 0.0
      %362 = vmatpush1.msra.mxu0 0.0
      %363 = vmatprep.subr.mxu0 0.0
      %364 = vmatpush1.msra.mxu0 0.0
      %365 = vmatprep.subr.mxu0 0.0
      %366 = vmatpush1.msra.mxu0 0.0
      %367 = vmatprep.subr.mxu0 0.0
      %368 = vmatpush1.msra.mxu0 0.0
      %369 = vmatprep.subr.mxu0 0.0
      %370 = vmatpush1.msra.mxu0 0.0
      %371 = vmatprep.subr.mxu0 0.0
      %372 = vmatpush1.msra.mxu0 0.0
      %373 = vmatprep.subr.mxu0 0.0
      %374 = vmatpush1.msra.mxu0 0.0
      %375 = vmatprep.subr.mxu0 0.0
      %376 = vmatpush1.msra.mxu0 0.0
      %377 = vmatprep.subr.mxu0 0.0
      %378 = vmatpush1.msra.mxu0 0.0
      %379 = vmatprep.subr.mxu0 0.0
      %380 = vmatpush1.msra.mxu0 0.0
      %381 = vmatprep.subr.mxu0 0.0
      %382 = vmatpush1.msra.mxu0 0.0
      %383 = vmatprep.subr.mxu0 0.0
      %384 = vmatpush1.msra.mxu0 0.0
      %385 = vmatprep.subr.mxu0 0.0
      %386 = vmatpush1.msra.mxu0 0.0
      %387 = vmatprep.subr.mxu0 0.0
      %388 = vmatpush1.msra.mxu0 0.0
      %389 = vmatprep.subr.mxu0 0.0
      %390 = vmatpush1.msra.mxu0 0.0
      %391 = vmatprep.subr.mxu0 0.0
      %392 = vmatpush1.msra.mxu0 0.0
      %393 = vmatprep.subr.mxu0 0.0
      %394 = vmatpush1.msra.mxu0 0.0
      %395 = vmatprep.subr.mxu0 0.0
      %396 = vmatpush1.msra.mxu0 0.0
      %397 = vmatprep.subr.mxu0 0.0
      %398 = vmatpush1.msra.mxu0 0.0
      %399 = vmatprep.subr.mxu0 0.0
      %400 = vmatpush1.msra.mxu0 0.0
      %401 = vmatprep.subr.mxu0 0.0
      %402 = vmatpush1.msra.mxu0 0.0
      %403 = vmatprep.subr.mxu0 0.0
      %404 = vmatpush1.msra.mxu0 0.0
      %405 = vmatprep.subr.mxu0 0.0
      %406 = vmatpush1.msra.mxu0 0.0
      %407 = vmatprep.subr.mxu0 0.0
      %408 = vmatpush1.msra.mxu0 0.0
      %409 = vmatprep.subr.mxu0 0.0
      %410 = vmatpush1.msra.mxu0 0.0
      %411 = vmatprep.subr.mxu0 0.0
      %412 = vmatpush1.msra.mxu0 0.0
      %413 = vmatprep.subr.mxu0 0.0
      %414 = vmatpush1.msra.mxu0 0.0
      %415 = vmatprep.subr.mxu0 0.0
      %416 = vmatpush1.msra.mxu0 0.0
      %417 = vmatprep.subr.mxu0 0.0
      %418 = vmatpush1.msra.mxu0 0.0
      %419 = vmatprep.subr.mxu0 0.0
      %420 = vmatpush1.msra.mxu0 0.0
      %421 = vmatprep.mubr.f32.mxu0 0.0
      %422 = vmatmul.mubr.f32.gmra.mrb[0].mxu0 %v198
      %v423 = vpop.f32.mrb[0].mxu0
      %v424 = vadd.f32 0.0, %v423
      %v425 = vpop.f32.mrb[0].mxu0
      %v426 = vadd.f32 0.0, %v425
      %427 = vmatprep.mubr.f32.mxu0 0.0
      %428 = vmatmul.mubr.f32.gmra.mrb[0].mxu0 %v201
      %v429 = vpop.f32.mrb[0].mxu0
      %v430 = vadd.f32 0.0, %v429
      %v431 = vpop.f32.mrb[0].mxu0
      %v432 = vadd.f32 0.0, %v431
      %433 = vdwg.mxu0
      %434 = vmatprep.subr.mxu0 %v193
      %435 = vmatpush1.msra.mxu0 %v192
      %436 = vmatprep.subr.mxu0 0.0
      %437 = vmatpush1.msra.mxu0 0.0
      %438 = vmatprep.subr.mxu0 0.0
      %439 = vmatpush1.msra.mxu0 0.0
      %440 = vmatprep.subr.mxu0 0.0
      %441 = vmatpush1.msra.mxu0 0.0
      %442 = vmatprep.subr.mxu0 0.0
      %443 = vmatpush1.msra.mxu0 0.0
      %444 = vmatprep.subr.mxu0 0.0
      %445 = vmatpush1.msra.mxu0 0.0
      %446 = vmatprep.subr.mxu0 0.0
      %447 = vmatpush1.msra.mxu0 0.0
      %448 = vmatprep.subr.mxu0 0.0
      %449 = vmatpush1.msra.mxu0 0.0
      %450 = vmatprep.subr.mxu0 0.0
      %451 = vmatpush1.msra.mxu0 0.0
      %452 = vmatprep.subr.mxu0 0.0
      %453 = vmatpush1.msra.mxu0 0.0
      %454 = vmatprep.subr.mxu0 0.0
      %455 = vmatpush1.msra.mxu0 0.0
      %456 = vmatprep.subr.mxu0 0.0
      %457 = vmatpush1.msra.mxu0 0.0
      %458 = vmatprep.subr.mxu0 0.0
      %459 = vmatpush1.msra.mxu0 0.0
      %460 = vmatprep.subr.mxu0 0.0
      %461 = vmatpush1.msra.mxu0 0.0
      %462 = vmatprep.subr.mxu0 0.0
      %463 = vmatpush1.msra.mxu0 0.0
      %464 = vmatprep.subr.mxu0 0.0
      %465 = vmatpush1.msra.mxu0 0.0
      %466 = vmatprep.subr.mxu0 0.0
      %467 = vmatpush1.msra.mxu0 0.0
      %468 = vmatprep.subr.mxu0 0.0
      %469 = vmatpush1.msra.mxu0 0.0
      %470 = vmatprep.subr.mxu0 0.0
      %471 = vmatpush1.msra.mxu0 0.0
      %472 = vmatprep.subr.mxu0 0.0
      %473 = vmatpush1.msra.mxu0 0.0
      %474 = vmatprep.subr.mxu0 0.0
      %475 = vmatpush1.msra.mxu0 0.0
      %476 = vmatprep.subr.mxu0 0.0
      %477 = vmatpush1.msra.mxu0 0.0
      %478 = vmatprep.subr.mxu0 0.0
      %479 = vmatpush1.msra.mxu0 0.0
      %480 = vmatprep.subr.mxu0 0.0
      %481 = vmatpush1.msra.mxu0 0.0
      %482 = vmatprep.subr.mxu0 0.0
      %483 = vmatpush1.msra.mxu0 0.0
      %484 = vmatprep.subr.mxu0 0.0
      %485 = vmatpush1.msra.mxu0 0.0
      %486 = vmatprep.subr.mxu0 0.0
      %487 = vmatpush1.msra.mxu0 0.0
      %488 = vmatprep.subr.mxu0 0.0
      %489 = vmatpush1.msra.mxu0 0.0
      %490 = vmatprep.subr.mxu0 0.0
      %491 = vmatpush1.msra.mxu0 0.0
      %492 = vmatprep.subr.mxu0 0.0
      %493 = vmatpush1.msra.mxu0 0.0
      %494 = vmatprep.subr.mxu0 0.0
      %495 = vmatpush1.msra.mxu0 0.0
      %496 = vmatprep.subr.mxu0 0.0
      %497 = vmatpush1.msra.mxu0 0.0
      %498 = vmatprep.mubr.f32.mxu0 0.0
      %499 = vmatmul.mubr.f32.gmra.mrb[0].mxu0 %v198
      %v500 = vpop.f32.mrb[0].mxu0
      %v501 = vadd.f32 0.0, %v500
      %v502 = vpop.f32.mrb[0].mxu0
      %v503 = vadd.f32 0.0, %v502
      %504 = vmatprep.mubr.f32.mxu0 0.0
      %505 = vmatmul.mubr.f32.gmra.mrb[0].mxu0 %v201
      %v506 = vpop.f32.mrb[0].mxu0
      %v507 = vadd.f32 0.0, %v506
      %v508 = vpop.f32.mrb[0].mxu0
      %v509 = vadd.f32 0.0, %v508
      %510 = vdwg.mxu0
      %s511 = smul.u32 %s15, 1024
      %v512 = vlaneseq
      %v513 = vand.u32 %v512, 127
      %v514 = vadd.s32 %v513, 128
      %v515 = vadd.s32 %v513, 256
      %v516 = vadd.s32 %v513, 384
      %v517 = vadd.s32 %v513, 512
      %v518 = vadd.s32 %v513, 640
      %v519 = vadd.s32 %v513, 768
      %v520 = vadd.s32 %v513, 896
      %v521 = vstv %s511
      %v522 = vadd.s32 %v521, %v513
      %v523 = vadd.s32 %v521, %v514
      %v524 = vadd.s32 %v521, %v515
      %v525 = vadd.s32 %v521, %v516
      %v526 = vadd.s32 %v521, %v517
      %v527 = vadd.s32 %v521, %v518
      %v528 = vadd.s32 %v521, %v519
      %v529 = vadd.s32 %v521, %v520
      %vm530 = vcmp.lt.s32.totalorder %v522, 2000
      %vm531 = vcmp.lt.s32.totalorder %v523, 2000
      %vm532 = vcmp.lt.s32.totalorder %v524, 2000
      %vm533 = vcmp.lt.s32.totalorder %v525, 2000
      %vm534 = vcmp.lt.s32.totalorder %v526, 2000
      %vm535 = vcmp.lt.s32.totalorder %v527, 2000
      %vm536 = vcmp.lt.s32.totalorder %v528, 2000
      %vm537 = vcmp.lt.s32.totalorder %v529, 2000
      %v538 = vsel %vm530, %v270, 0.0
      %v539 = vsel %vm531, %v272, 0.0
      %v540 = vsel %vm532, %v347, 0.0
      %v541 = vsel %vm533, %v349, 0.0
      %v542 = vsel %vm534, %v424, 0.0
      %v543 = vsel %vm535, %v426, 0.0
      %v544 = vsel %vm536, %v501, 0.0
      %v545 = vsel %vm537, %v503, 0.0
      %v546 = vsel %vm530, %v276, 0.0
      %v547 = vsel %vm531, %v278, 0.0
      %v548 = vsel %vm532, %v353, 0.0
      %v549 = vsel %vm533, %v355, 0.0
      %v550 = vsel %vm534, %v430, 0.0
      %v551 = vsel %vm535, %v432, 0.0
      %v552 = vsel %vm536, %v507, 0.0
      %v553 = vsel %vm537, %v509, 0.0
      %v554 = vadd.f32 %v538, %v539
      %v555 = vadd.f32 %v554, %v540
      %v556 = vadd.f32 %v555, %v541
      %v557 = vadd.f32 %v556, %v542
      %v558 = vadd.f32 %v557, %v543
      %v559 = vadd.f32 %v558, %v544
      %v560 = vadd.f32 %v559, %v545
      %561 = vadd.xlane.f32.xlu0 %v560
      %v562 = vpop.xlane.xlu0 %561
      %v563 = vadd.f32 %v546, %v547
      %v564 = vadd.f32 %v563, %v548
      %v565 = vadd.f32 %v564, %v549
      %v566 = vadd.f32 %v565, %v550
      %v567 = vadd.f32 %v566, %v551
      %v568 = vadd.f32 %v567, %v552
      %v569 = vadd.f32 %v568, %v553
      %570 = vadd.xlane.f32.xlu0 %v569
      %v571 = vpop.xlane.xlu0 %570
      %vm572 = vcmask 7168
      %573 = vst.msk [vmem:[%s180] sm:$0xff] %vm572, %v562
      %574 = vst.msk [vmem:[%s180 + $0x8] sm:$0xff] %vm572, %v571
      %v575 = vmul.f32 %v538, %v538
      %v576 = vmul.f32 %v539, %v539
      %v577 = vmul.f32 %v540, %v540
      %v578 = vmul.f32 %v541, %v541
      %v579 = vmul.f32 %v542, %v542
      %v580 = vmul.f32 %v543, %v543
      %v581 = vmul.f32 %v544, %v544
      %v582 = vmul.f32 %v545, %v545
      %v583 = vmul.f32 %v546, %v546
      %v584 = vmul.f32 %v547, %v547
      %v585 = vmul.f32 %v548, %v548
      %v586 = vmul.f32 %v549, %v549
      %v587 = vmul.f32 %v550, %v550
      %v588 = vmul.f32 %v551, %v551
      %v589 = vmul.f32 %v552, %v552
      %v590 = vmul.f32 %v553, %v553
      %v591 = vadd.f32 %v575, %v576
      %v592 = vadd.f32 %v591, %v577
      %v593 = vadd.f32 %v592, %v578
      %v594 = vadd.f32 %v593, %v579
      %v595 = vadd.f32 %v594, %v580
      %v596 = vadd.f32 %v595, %v581
      %v597 = vadd.f32 %v596, %v582
      %598 = vadd.xlane.f32.xlu0 %v597
      %v599 = vpop.xlane.xlu0 %598
      %v600 = vadd.f32 %v583, %v584
      %v601 = vadd.f32 %v600, %v585
      %v602 = vadd.f32 %v601, %v586
      %v603 = vadd.f32 %v602, %v587
      %v604 = vadd.f32 %v603, %v588
      %v605 = vadd.f32 %v604, %v589
      %v606 = vadd.f32 %v605, %v590
      %607 = vadd.xlane.f32.xlu0 %v606
      %v608 = vpop.xlane.xlu0 %607
      %609 = vst.msk [vmem:[%s185] sm:$0xff] %vm572, %v599
      %610 = vst.msk [vmem:[%s185 + $0x8] sm:$0xff] %vm572, %v608
      %p611 = scmp.lt.s32.totalorder %s15, 1
      %s612 = scalar_select %p611, %s15, 1
      %s613 = smul.addr %s612, 2
      %s614 = smul.addr %s613, 8
      %s615 = scalar_lea.vmem %s2, %s614
      %p616 = scmp.lt.s32.totalorder %s15, 1
      %s617 = scalar_select %p616, %s15, 1
      %s618 = smul.addr %s617, 2
      %s619 = smul.addr %s618, 8
      %s620 = scalar_lea.vmem %s3, %s619
      // Predicated region
      $region29: #{_lambda_.4} parent=27 // pred_check
        %p621 = pneg %p80
      $region30: #{_lambda_.4} parent=27 // pred_check_branch
        %623 = sbr.rel (%p621) target = $region32
      $region31: #{_lambda_.4} parent=27 // pred_region
        _
      $region32: #{_lambda_.4} parent=27 // pred_fallthru
        _
      // Predicated region
      $region33: #{_lambda_.4} parent=27 // pred_check
        %p624 = pneg %p106
      $region34: #{_lambda_.4} parent=27 // pred_check_branch
        %626 = sbr.rel (%p624) target = $region36
      $region35: #{_lambda_.4} parent=27 // pred_region
        _
      $region36: #{_lambda_.4} parent=27 // pred_fallthru
        _
    $region28: #{_lambda_.4} parent=5 // pred_fallthru
      _
    %p627 = scmp.le.s32.totalorder 2, %s10
    // Predicated region
    $region37: #{_lambda_.4} parent=5 // pred_check
      %p628 = pneg %p627
    $region38: #{_lambda_.4} parent=5 // pred_check_branch
      %630 = sbr.rel (%p628) target = $region40
    $region39: #{_lambda_.4} parent=5 // pred_region
      %s631 = ssub.s32 %s10, 2
      // Predicated region
      $region41: #{_lambda_.4} parent=39 // pred_check
        %p632 = pneg %p86
      $region42: #{_lambda_.4} parent=39 // pred_check_branch
        %634 = sbr.rel (%p632) target = $region44
      $region43: #{_lambda_.4} parent=39 // pred_region
        %p635 = scmp.lt.s32.totalorder %s16, 1
        %s636 = scalar_select %p635, %s16, 1
        %s637 = smul.addr %s636, 2
        %s638 = smul.addr %s637, 8
        %s639 = scalar_lea.vmem %s2, %s638
      $region44: #{_lambda_.4} parent=39 // pred_fallthru
        _
      // Predicated region
      $region45: #{_lambda_.4} parent=39 // pred_check
        %p640 = pneg %p112
      $region46: #{_lambda_.4} parent=39 // pred_check_branch
        %642 = sbr.rel (%p640) target = $region48
      $region47: #{_lambda_.4} parent=39 // pred_region
        %p643 = scmp.lt.s32.totalorder %s16, 1
        %s644 = scalar_select %p643, %s16, 1
        %s645 = smul.addr %s644, 2
        %s646 = smul.addr %s645, 8
        %s647 = scalar_lea.vmem %s3, %s646
      $region48: #{_lambda_.4} parent=39 // pred_fallthru
        _
    $region40: #{_lambda_.4} parent=5 // pred_fallthru
      _
  $region6: #{_lambda_.4} parent=0 // loop_footer
    %s14 = sadd.s32 1, %s10
  $region7: #{_lambda_.4} parent=0 // loop_footer_branch
    %9 = sbr.rel target = $region3
  $region8: #{_lambda_.4} parent=0 // loop_exit
    _

// kernel: _lambda_.5
$region0: #{_lambda_.5}
  #allocation0 [shape = 'u32[]', space=smem, size = 0x4, offset = 0x4, fixed_abs, tag = 'smem constant byte address 0x4 - core index']
  #allocation1 [shape = 'u32[144,128]{1,0:T(1,128)}', space=vmem, size = 0x12000, scoped, tag = 'internal scratch']
  %s0 = inlined_call_operand.vmem [shape: f32[8,2000], index: 0, kind: input, shape index: {}]
  %s1 = inlined_call_operand.vmem [shape: f32[16,8], index: 1, kind: input, shape index: {}]
  %s2 = inlined_call_operand.vmem [shape: f32[16,1], index: 2, kind: input, shape index: {}]
  %s3 = inlined_call_operand.vmem [shape: f32[16,2000], index: 3, kind: output, shape index: {}]
  %s4 = sld [smem:[#allocation0]]
  $region64: #{_lambda_.5} parent=0
    _
  %s6 = ssub.s32 1, %s4
  %s7 = scalar_select 0, %s6, %s4
  $region1: #{_lambda_.5} parent=0
    #allocation2 [shape = 'u8[131072]{0}', space=vmem, size = 0x20000, scoped, tag = 'output window, operand 0']
    loop: start=0, step=1, limit=4
    $region2: #{_lambda_.5} parent=1 // loop_pre_header
      _
    $region3: #{_lambda_.5} parent=1 // loop_header
      %s9 = sphi 0, %s13
      %p10 = scmp.ge.s32.totalorder %s9, 4
      %s19 = sphi 0, %s21
      %s22 = sphi 0, %s19
      %s23 = sphi 0, %s22
      %s39 = sphi 0, %s23
      %s43 = sphi 0, %s43
      %s45 = sphi 0, %s43
      %s46 = sphi 0, %s45
      %s60 = sphi 0, %s46
      %s64 = sphi 0, %s64
      %s66 = sphi 0, %s64
      %s67 = sphi 0, %s66
      %s81 = sphi 0, %s67
      %s87 = sphi 0, %s89
      %s90 = sphi 0, %s87
      %s91 = sphi 0, %s90
      %s107 = sphi 0, %s91
    $region4: #{_lambda_.5} parent=1 // loop_header_branch
      %12 = sbr.rel (%p10) target = $region8
    $region5: #{_lambda_.5} parent=1 // loop_body
      %s14 = ssub.s32 %s9, 1
      %s15 = ssub.s32 %s9, 2
      %s16 = sadd.s32 %s9, 1
      %s17 = ssub.s32 %s9, %s16
      %p18 = scmp.eq.s32.totalorder %s17, 0
      %s20 = sadd.s32 %s19, 1
      %s21 = scalar_select %p18, %s19, %s20
      %p24 = pneg %p18
      %p25 = scmp.eq.s32.totalorder %s9, 1
      %p26 = por %p24, %p25
      %p27 = scmp.ne.s32.totalorder %s19, %s22
      %p28 = scmp.eq.s32.totalorder %s9, 0
      %p29 = por %p27, %p28
      %p30 = scmp.ne.s32.totalorder %s19, %s22
      %p31 = scmp.eq.s32.totalorder %s14, 1
      %p32 = por %p30, %p31
      %p33 = scmp.ne.s32.totalorder %s22, %s23
      %p34 = scmp.eq.s32.totalorder %s14, 0
      %p35 = por %p33, %p34
      %p36 = scmp.ne.s32.totalorder %s22, %s23
      %p37 = scmp.eq.s32.totalorder %s15, 1
      %p38 = por %p36, %p37
      %p40 = scmp.ne.s32.totalorder %s23, %s39
      %p41 = scmp.eq.s32.totalorder %s15, 0
      %p42 = por %p40, %p41
      %s44 = sadd.s32 %s43, 1
      %p47 = scmp.eq.s32.totalorder %s9, 1
      %p48 = scmp.ne.s32.totalorder %s43, %s45
      %p49 = scmp.eq.s32.totalorder %s9, 0
      %p50 = por %p48, %p49
      %p51 = scmp.ne.s32.totalorder %s43, %s45
      %p52 = scmp.eq.s32.totalorder %s14, 1
      %p53 = por %p51, %p52
      %p54 = scmp.ne.s32.totalorder %s45, %s46
      %p55 = scmp.eq.s32.totalorder %s14, 0
      %p56 = por %p54, %p55
      %p57 = scmp.ne.s32.totalorder %s45, %s46
      %p58 = scmp.eq.s32.totalorder %s15, 1
      %p59 = por %p57, %p58
      %p61 = scmp.ne.s32.totalorder %s46, %s60
      %p62 = scmp.eq.s32.totalorder %s15, 0
      %p63 = por %p61, %p62
      %s65 = sadd.s32 %s64, 1
      %p68 = scmp.eq.s32.totalorder %s9, 1
      %p69 = scmp.ne.s32.totalorder %s64, %s66
      %p70 = scmp.eq.s32.totalorder %s9, 0
      %p71 = por %p69, %p70
      %p72 = scmp.ne.s32.totalorder %s64, %s66
      %p73 = scmp.eq.s32.totalorder %s14, 1
      %p74 = por %p72, %p73
      %p75 = scmp.ne.s32.totalorder %s66, %s67
      %p76 = scmp.eq.s32.totalorder %s14, 0
      %p77 = por %p75, %p76
      %p78 = scmp.ne.s32.totalorder %s66, %s67
      %p79 = scmp.eq.s32.totalorder %s15, 1
      %p80 = por %p78, %p79
      %p82 = scmp.ne.s32.totalorder %s67, %s81
      %p83 = scmp.eq.s32.totalorder %s15, 0
      %p84 = por %p82, %p83
      %s85 = ssub.s32 %s9, %s16
      %p86 = scmp.eq.s32.totalorder %s85, 0
      %s88 = sadd.s32 %s87, 1
      %s89 = scalar_select %p86, %s87, %s88
      %p92 = pneg %p86
      %p93 = scmp.eq.s32.totalorder %s9, 1
      %p94 = por %p92, %p93
      %p95 = scmp.ne.s32.totalorder %s87, %s90
      %p96 = scmp.eq.s32.totalorder %s9, 0
      %p97 = por %p95, %p96
      %p98 = scmp.ne.s32.totalorder %s87, %s90
      %p99 = scmp.eq.s32.totalorder %s14, 1
      %p100 = por %p98, %p99
      %p101 = scmp.ne.s32.totalorder %s90, %s91
      %p102 = scmp.eq.s32.totalorder %s14, 0
      %p103 = por %p101, %p102
      %p104 = scmp.ne.s32.totalorder %s90, %s91
      %p105 = scmp.eq.s32.totalorder %s15, 1
      %p106 = por %p104, %p105
      %p108 = scmp.ne.s32.totalorder %s91, %s107
      %p109 = scmp.eq.s32.totalorder %s15, 0
      %p110 = por %p108, %p109
      %p111 = scmp.le.s32.totalorder 1, %s9
      %p112 = scmp.lt.s32.totalorder %s9, 3
      %p113 = pnand %p111, %p112
      %p114 = pneg %p113
      // Predicated region
      $region9: #{_lambda_.5} parent=5 // pred_check
        _
      $region10: #{_lambda_.5} parent=5 // pred_check_branch
        %116 = sbr.rel (%p113) target = $region12
      $region11: #{_lambda_.5} parent=5 // pred_region
        %s117 = ssub.s32 %s9, 1
        // Predicated region
        $region13: #{_lambda_.5} parent=11 // pred_check
          %p118 = pneg %p56
        $region14: #{_lambda_.5} parent=11 // pred_check_branch
          %120 = sbr.rel (%p118) target = $region16
        $region15: #{_lambda_.5} parent=11 // pred_region
          _
        $region16: #{_lambda_.5} parent=11 // pred_fallthru
          _
        // Predicated region
        $region17: #{_lambda_.5} parent=11 // pred_check
          %p121 = pneg %p77
        $region18: #{_lambda_.5} parent=11 // pred_check_branch
          %123 = sbr.rel (%p121) target = $region20
        $region19: #{_lambda_.5} parent=11 // pred_region
          _
        $region20: #{_lambda_.5} parent=11 // pred_fallthru
          _
      $region12: #{_lambda_.5} parent=5 // pred_fallthru
        _
      %p124 = scmp.lt.s32.totalorder %s9, 2
      // Predicated region
      $region21: #{_lambda_.5} parent=5 // pred_check
        %p125 = pneg %p124
      $region22: #{_lambda_.5} parent=5 // pred_check_branch
        %127 = sbr.rel (%p125) target = $region24
      $region23: #{_lambda_.5} parent=5 // pred_region
        // Predicated region
        $region25: #{_lambda_.5} parent=23 // pred_check
          %p128 = pneg %p29
        $region26: #{_lambda_.5} parent=23 // pred_check_branch
          %130 = sbr.rel (%p128) target = $region28
        $region27: #{_lambda_.5} parent=23 // pred_region
          %s131 = smul.u32 8, %s9
          %p132 = scmp.lt.s32.totalorder %s131, 15
          %s133 = scalar_select %p132, %s131, 15
          %s134 = smul.addr %s133, 8
          %s135 = scalar_lea.vmem %s0, %s134
          %s136 = smul.u32 8, %s9
        $region28: #{_lambda_.5} parent=23 // pred_fallthru
          _
      $region24: #{_lambda_.5} parent=5 // pred_fallthru
        _
      %p137 = scmp.le.s32.totalorder 1, %s9
      %p138 = scmp.lt.s32.totalorder %s9, 3
      %p139 = pnand %p137, %p138
      %p140 = pneg %p139
      // Predicated region
      $region29: #{_lambda_.5} parent=5 // pred_check
        _
      $region30: #{_lambda_.5} parent=5 // pred_check_branch
        %142 = sbr.rel (%p139) target = $region32
      $region31: #{_lambda_.5} parent=5 // pred_region
        %s143 = ssub.s32 %s9, 1
        %s144 = smul.u32 8, %s14
        %p145 = scmp.lt.s32.totalorder %s144, 15
        %s146 = scalar_select %p145, %s144, 15
        %s147 = smul.addr %s146, 8
        %s148 = scalar_lea.vmem %s0, %s147
        %p149 = pneg %p35
        %p150 = pneg %p32
        %p151 = pneg %p56
        %p152 = pneg %p53
        %p153 = pneg %p77
        %p154 = pneg %p74
        %p155 = pneg %p103
        %p156 = pneg %p100
        %s157 = sand.u32 %s90, 1
        %s158 = sand.u32 %s90, 1
        %s159 = smul.addr %s158, 128
        %s160 = scalar_lea.vmem [#allocation2], %s159
        %s161 = smul.u32 8, %s14
        %p162 = scmp.lt.s32.totalorder %s161, 15
        %s163 = scalar_select %p162, %s161, 15
        %s164 = smul.addr %s163, 8
        %s165 = scalar_lea.vmem %s0, %s164
        %s166 = smul.u32 8, %s14
        %s167 = smul.u32 8, %s14
        %v168 = vld [vmem:[%s165] sm:$0xff]
        %v169 = vld [vmem:[%s165 + $0x8] sm:$0xff]
        %v170 = vld [vmem:[%s165 + $0x10] sm:$0xff]
        %v171 = vld [vmem:[%s165 + $0x18] sm:$0xff]
        %v172 = vld [vmem:[%s165 + $0x20] sm:$0xff]
        %v173 = vld [vmem:[%s165 + $0x28] sm:$0xff]
        %v174 = vld [vmem:[%s165 + $0x30] sm:$0xff]
        %v175 = vld [vmem:[%s165 + $0x38] sm:$0xff]
        %v176 = vld [vmem:[%s1] sm:$0xff]
        %v177 = vld [vmem:[%s1 + $0x8] sm:$0xff]
        %v178 = vld [vmem:[%s2] sm:$0xff]
        %v179 = vld [vmem:[%s2 + $0x8] sm:$0xff]
        %181 = vset.pattern.permute.xlu0 0
        %182 = vperm.xlu0 %181, %v178
        %v183 = vpop.permute.xlu0 %182
        %186 = vset.pattern.permute.xlu0 0
        %187 = vperm.xlu0 %186, %v179
        %v188 = vpop.permute.xlu0 %187
        %vm190 = vcmask 64512
        %v192 = vsel %vm190, %v176, 0
        %v195 = vsel %vm190, %v177, 0
        %197 = vmatprep.subr.mxu0 %v169
        %198 = vmatpush1.msra.mxu0 %v168
        %199 = vmatprep.subr.mxu0 0.0
        %200 = vmatpush1.msra.mxu0 0.0
        %201 = vmatprep.subr.mxu0 0.0
        %202 = vmatpush1.msra.mxu0 0.0
        %203 = vmatprep.subr.mxu0 0.0
        %204 = vmatpush1.msra.mxu0 0.0
        %205 = vmatprep.subr.mxu0 0.0
        %206 = vmatpush1.msra.mxu0 0.0
        %207 = vmatprep.subr.mxu0 0.0
        %208 = vmatpush1.msra.mxu0 0.0
        %209 = vmatprep.subr.mxu0 0.0
        %210 = vmatpush1.msra.mxu0 0.0
        %211 = vmatprep.subr.mxu0 0.0
        %212 = vmatpush1.msra.mxu0 0.0
        %213 = vmatprep.subr.mxu0 0.0
        %214 = vmatpush1.msra.mxu0 0.0
        %215 = vmatprep.subr.mxu0 0.0
        %216 = vmatpush1.msra.mxu0 0.0
        %217 = vmatprep.subr.mxu0 0.0
        %218 = vmatpush1.msra.mxu0 0.0
        %219 = vmatprep.subr.mxu0 0.0
        %220 = vmatpush1.msra.mxu0 0.0
        %221 = vmatprep.subr.mxu0 0.0
        %222 = vmatpush1.msra.mxu0 0.0
        %223 = vmatprep.subr.mxu0 0.0
        %224 = vmatpush1.msra.mxu0 0.0
        %225 = vmatprep.subr.mxu0 0.0
        %226 = vmatpush1.msra.mxu0 0.0
        %227 = vmatprep.subr.mxu0 0.0
        %228 = vmatpush1.msra.mxu0 0.0
        %229 = vmatprep.subr.mxu0 0.0
        %230 = vmatpush1.msra.mxu0 0.0
        %231 = vmatprep.subr.mxu0 0.0
        %232 = vmatpush1.msra.mxu0 0.0
        %233 = vmatprep.subr.mxu0 0.0
        %234 = vmatpush1.msra.mxu0 0.0
        %235 = vmatprep.subr.mxu0 0.0
        %236 = vmatpush1.msra.mxu0 0.0
        %237 = vmatprep.subr.mxu0 0.0
        %238 = vmatpush1.msra.mxu0 0.0
        %239 = vmatprep.subr.mxu0 0.0
        %240 = vmatpush1.msra.mxu0 0.0
        %241 = vmatprep.subr.mxu0 0.0
        %242 = vmatpush1.msra.mxu0 0.0
        %243 = vmatprep.subr.mxu0 0.0
        %244 = vmatpush1.msra.mxu0 0.0
        %245 = vmatprep.subr.mxu0 0.0
        %246 = vmatpush1.msra.mxu0 0.0
        %247 = vmatprep.subr.mxu0 0.0
        %248 = vmatpush1.msra.mxu0 0.0
        %249 = vmatprep.subr.mxu0 0.0
        %250 = vmatpush1.msra.mxu0 0.0
        %251 = vmatprep.subr.mxu0 0.0
        %252 = vmatpush1.msra.mxu0 0.0
        %253 = vmatprep.subr.mxu0 0.0
        %254 = vmatpush1.msra.mxu0 0.0
        %255 = vmatprep.subr.mxu0 0.0
        %256 = vmatpush1.msra.mxu0 0.0
        %257 = vmatprep.subr.mxu0 0.0
        %258 = vmatpush1.msra.mxu0 0.0
        %259 = vmatprep.subr.mxu0 0.0
        %260 = vmatpush1.msra.mxu0 0.0
        %261 = vmatprep.mubr.f32.mxu0 0.0
        %262 = vmatmul.mubr.f32.gmra.mrb[0].mxu0 %v192
        %v263 = vpop.f32.mrb[0].mxu0
        %v264 = vadd.f32 %v183, %v263
        %v265 = vpop.f32.mrb[0].mxu0
        %v266 = vadd.f32 %v183, %v265
        %267 = vmatprep.mubr.f32.mxu0 0.0
        %268 = vmatmul.mubr.f32.gmra.mrb[0].mxu0 %v195
        %v269 = vpop.f32.mrb[0].mxu0
        %v270 = vadd.f32 %v188, %v269
        %v271 = vpop.f32.mrb[0].mxu0
        %v272 = vadd.f32 %v188, %v271
        %273 = vdwg.mxu0
        %274 = vmatprep.subr.mxu0 %v171
        %275 = vmatpush1.msra.mxu0 %v170
        %276 = vmatprep.subr.mxu0 0.0
        %277 = vmatpush1.msra.mxu0 0.0
        %278 = vmatprep.subr.mxu0 0.0
        %279 = vmatpush1.msra.mxu0 0.0
        %280 = vmatprep.subr.mxu0 0.0
        %281 = vmatpush1.msra.mxu0 0.0
        %282 = vmatprep.subr.mxu0 0.0
        %283 = vmatpush1.msra.mxu0 0.0
        %284 = vmatprep.subr.mxu0 0.0
        %285 = vmatpush1.msra.mxu0 0.0
        %286 = vmatprep.subr.mxu0 0.0
        %287 = vmatpush1.msra.mxu0 0.0
        %288 = vmatprep.subr.mxu0 0.0
        %289 = vmatpush1.msra.mxu0 0.0
        %290 = vmatprep.subr.mxu0 0.0
        %291 = vmatpush1.msra.mxu0 0.0
        %292 = vmatprep.subr.mxu0 0.0
        %293 = vmatpush1.msra.mxu0 0.0
        %294 = vmatprep.subr.mxu0 0.0
        %295 = vmatpush1.msra.mxu0 0.0
        %296 = vmatprep.subr.mxu0 0.0
        %297 = vmatpush1.msra.mxu0 0.0
        %298 = vmatprep.subr.mxu0 0.0
        %299 = vmatpush1.msra.mxu0 0.0
        %300 = vmatprep.subr.mxu0 0.0
        %301 = vmatpush1.msra.mxu0 0.0
        %302 = vmatprep.subr.mxu0 0.0
        %303 = vmatpush1.msra.mxu0 0.0
        %304 = vmatprep.subr.mxu0 0.0
        %305 = vmatpush1.msra.mxu0 0.0
        %306 = vmatprep.subr.mxu0 0.0
        %307 = vmatpush1.msra.mxu0 0.0
        %308 = vmatprep.subr.mxu0 0.0
        %309 = vmatpush1.msra.mxu0 0.0
        %310 = vmatprep.subr.mxu0 0.0
        %311 = vmatpush1.msra.mxu0 0.0
        %312 = vmatprep.subr.mxu0 0.0
        %313 = vmatpush1.msra.mxu0 0.0
        %314 = vmatprep.subr.mxu0 0.0
        %315 = vmatpush1.msra.mxu0 0.0
        %316 = vmatprep.subr.mxu0 0.0
        %317 = vmatpush1.msra.mxu0 0.0
        %318 = vmatprep.subr.mxu0 0.0
        %319 = vmatpush1.msra.mxu0 0.0
        %320 = vmatprep.subr.mxu0 0.0
        %321 = vmatpush1.msra.mxu0 0.0
        %322 = vmatprep.subr.mxu0 0.0
        %323 = vmatpush1.msra.mxu0 0.0
        %324 = vmatprep.subr.mxu0 0.0
        %325 = vmatpush1.msra.mxu0 0.0
        %326 = vmatprep.subr.mxu0 0.0
        %327 = vmatpush1.msra.mxu0 0.0
        %328 = vmatprep.subr.mxu0 0.0
        %329 = vmatpush1.msra.mxu0 0.0
        %330 = vmatprep.subr.mxu0 0.0
        %331 = vmatpush1.msra.mxu0 0.0
        %332 = vmatprep.subr.mxu0 0.0
        %333 = vmatpush1.msra.mxu0 0.0
        %334 = vmatprep.subr.mxu0 0.0
        %335 = vmatpush1.msra.mxu0 0.0
        %336 = vmatprep.subr.mxu0 0.0
        %337 = vmatpush1.msra.mxu0 0.0
        %338 = vmatprep.mubr.f32.mxu0 0.0
        %339 = vmatmul.mubr.f32.gmra.mrb[0].mxu0 %v192
        %v340 = vpop.f32.mrb[0].mxu0
        %v341 = vadd.f32 %v183, %v340
        %v342 = vpop.f32.mrb[0].mxu0
        %v343 = vadd.f32 %v183, %v342
        %344 = vmatprep.mubr.f32.mxu0 0.0
        %345 = vmatmul.mubr.f32.gmra.mrb[0].mxu0 %v195
        %v346 = vpop.f32.mrb[0].mxu0
        %v347 = vadd.f32 %v188, %v346
        %v348 = vpop.f32.mrb[0].mxu0
        %v349 = vadd.f32 %v188, %v348
        %350 = vdwg.mxu0
        %351 = vmatprep.subr.mxu0 %v173
        %352 = vmatpush1.msra.mxu0 %v172
        %353 = vmatprep.subr.mxu0 0.0
        %354 = vmatpush1.msra.mxu0 0.0
        %355 = vmatprep.subr.mxu0 0.0
        %356 = vmatpush1.msra.mxu0 0.0
        %357 = vmatprep.subr.mxu0 0.0
        %358 = vmatpush1.msra.mxu0 0.0
        %359 = vmatprep.subr.mxu0 0.0
        %360 = vmatpush1.msra.mxu0 0.0
        %361 = vmatprep.subr.mxu0 0.0
        %362 = vmatpush1.msra.mxu0 0.0
        %363 = vmatprep.subr.mxu0 0.0
        %364 = vmatpush1.msra.mxu0 0.0
        %365 = vmatprep.subr.mxu0 0.0
        %366 = vmatpush1.msra.mxu0 0.0
        %367 = vmatprep.subr.mxu0 0.0
        %368 = vmatpush1.msra.mxu0 0.0
        %369 = vmatprep.subr.mxu0 0.0
        %370 = vmatpush1.msra.mxu0 0.0
        %371 = vmatprep.subr.mxu0 0.0
        %372 = vmatpush1.msra.mxu0 0.0
        %373 = vmatprep.subr.mxu0 0.0
        %374 = vmatpush1.msra.mxu0 0.0
        %375 = vmatprep.subr.mxu0 0.0
        %376 = vmatpush1.msra.mxu0 0.0
        %377 = vmatprep.subr.mxu0 0.0
        %378 = vmatpush1.msra.mxu0 0.0
        %379 = vmatprep.subr.mxu0 0.0
        %380 = vmatpush1.msra.mxu0 0.0
        %381 = vmatprep.subr.mxu0 0.0
        %382 = vmatpush1.msra.mxu0 0.0
        %383 = vmatprep.subr.mxu0 0.0
        %384 = vmatpush1.msra.mxu0 0.0
        %385 = vmatprep.subr.mxu0 0.0
        %386 = vmatpush1.msra.mxu0 0.0
        %387 = vmatprep.subr.mxu0 0.0
        %388 = vmatpush1.msra.mxu0 0.0
        %389 = vmatprep.subr.mxu0 0.0
        %390 = vmatpush1.msra.mxu0 0.0
        %391 = vmatprep.subr.mxu0 0.0
        %392 = vmatpush1.msra.mxu0 0.0
        %393 = vmatprep.subr.mxu0 0.0
        %394 = vmatpush1.msra.mxu0 0.0
        %395 = vmatprep.subr.mxu0 0.0
        %396 = vmatpush1.msra.mxu0 0.0
        %397 = vmatprep.subr.mxu0 0.0
        %398 = vmatpush1.msra.mxu0 0.0
        %399 = vmatprep.subr.mxu0 0.0
        %400 = vmatpush1.msra.mxu0 0.0
        %401 = vmatprep.subr.mxu0 0.0
        %402 = vmatpush1.msra.mxu0 0.0
        %403 = vmatprep.subr.mxu0 0.0
        %404 = vmatpush1.msra.mxu0 0.0
        %405 = vmatprep.subr.mxu0 0.0
        %406 = vmatpush1.msra.mxu0 0.0
        %407 = vmatprep.subr.mxu0 0.0
        %408 = vmatpush1.msra.mxu0 0.0
        %409 = vmatprep.subr.mxu0 0.0
        %410 = vmatpush1.msra.mxu0 0.0
        %411 = vmatprep.subr.mxu0 0.0
        %412 = vmatpush1.msra.mxu0 0.0
        %413 = vmatprep.subr.mxu0 0.0
        %414 = vmatpush1.msra.mxu0 0.0
        %415 = vmatprep.mubr.f32.mxu0 0.0
        %416 = vmatmul.mubr.f32.gmra.mrb[0].mxu0 %v192
        %v417 = vpop.f32.mrb[0].mxu0
        %v418 = vadd.f32 %v183, %v417
        %v419 = vpop.f32.mrb[0].mxu0
        %v420 = vadd.f32 %v183, %v419
        %421 = vmatprep.mubr.f32.mxu0 0.0
        %422 = vmatmul.mubr.f32.gmra.mrb[0].mxu0 %v195
        %v423 = vpop.f32.mrb[0].mxu0
        %v424 = vadd.f32 %v188, %v423
        %v425 = vpop.f32.mrb[0].mxu0
        %v426 = vadd.f32 %v188, %v425
        %427 = vdwg.mxu0
        %428 = vmatprep.subr.mxu0 %v175
        %429 = vmatpush1.msra.mxu0 %v174
        %430 = vmatprep.subr.mxu0 0.0
        %431 = vmatpush1.msra.mxu0 0.0
        %432 = vmatprep.subr.mxu0 0.0
        %433 = vmatpush1.msra.mxu0 0.0
        %434 = vmatprep.subr.mxu0 0.0
        %435 = vmatpush1.msra.mxu0 0.0
        %436 = vmatprep.subr.mxu0 0.0
        %437 = vmatpush1.msra.mxu0 0.0
        %438 = vmatprep.subr.mxu0 0.0
        %439 = vmatpush1.msra.mxu0 0.0
        %440 = vmatprep.subr.mxu0 0.0
        %441 = vmatpush1.msra.mxu0 0.0
        %442 = vmatprep.subr.mxu0 0.0
        %443 = vmatpush1.msra.mxu0 0.0
        %444 = vmatprep.subr.mxu0 0.0
        %445 = vmatpush1.msra.mxu0 0.0
        %446 = vmatprep.subr.mxu0 0.0
        %447 = vmatpush1.msra.mxu0 0.0
        %448 = vmatprep.subr.mxu0 0.0
        %449 = vmatpush1.msra.mxu0 0.0
        %450 = vmatprep.subr.mxu0 0.0
        %451 = vmatpush1.msra.mxu0 0.0
        %452 = vmatprep.subr.mxu0 0.0
        %453 = vmatpush1.msra.mxu0 0.0
        %454 = vmatprep.subr.mxu0 0.0
        %455 = vmatpush1.msra.mxu0 0.0
        %456 = vmatprep.subr.mxu0 0.0
        %457 = vmatpush1.msra.mxu0 0.0
        %458 = vmatprep.subr.mxu0 0.0
        %459 = vmatpush1.msra.mxu0 0.0
        %460 = vmatprep.subr.mxu0 0.0
        %461 = vmatpush1.msra.mxu0 0.0
        %462 = vmatprep.subr.mxu0 0.0
        %463 = vmatpush1.msra.mxu0 0.0
        %464 = vmatprep.subr.mxu0 0.0
        %465 = vmatpush1.msra.mxu0 0.0
        %466 = vmatprep.subr.mxu0 0.0
        %467 = vmatpush1.msra.mxu0 0.0
        %468 = vmatprep.subr.mxu0 0.0
        %469 = vmatpush1.msra.mxu0 0.0
        %470 = vmatprep.subr.mxu0 0.0
        %471 = vmatpush1.msra.mxu0 0.0
        %472 = vmatprep.subr.mxu0 0.0
        %473 = vmatpush1.msra.mxu0 0.0
        %474 = vmatprep.subr.mxu0 0.0
        %475 = vmatpush1.msra.mxu0 0.0
        %476 = vmatprep.subr.mxu0 0.0
        %477 = vmatpush1.msra.mxu0 0.0
        %478 = vmatprep.subr.mxu0 0.0
        %479 = vmatpush1.msra.mxu0 0.0
        %480 = vmatprep.subr.mxu0 0.0
        %481 = vmatpush1.msra.mxu0 0.0
        %482 = vmatprep.subr.mxu0 0.0
        %483 = vmatpush1.msra.mxu0 0.0
        %484 = vmatprep.subr.mxu0 0.0
        %485 = vmatpush1.msra.mxu0 0.0
        %486 = vmatprep.subr.mxu0 0.0
        %487 = vmatpush1.msra.mxu0 0.0
        %488 = vmatprep.subr.mxu0 0.0
        %489 = vmatpush1.msra.mxu0 0.0
        %490 = vmatprep.subr.mxu0 0.0
        %491 = vmatpush1.msra.mxu0 0.0
        %492 = vmatprep.mubr.f32.mxu0 0.0
        %493 = vmatmul.mubr.f32.gmra.mrb[0].mxu0 %v192
        %v494 = vpop.f32.mrb[0].mxu0
        %v495 = vadd.f32 %v183, %v494
        %v496 = vpop.f32.mrb[0].mxu0
        %v497 = vadd.f32 %v183, %v496
        %498 = vmatprep.mubr.f32.mxu0 0.0
        %499 = vmatmul.mubr.f32.gmra.mrb[0].mxu0 %v195
        %v500 = vpop.f32.mrb[0].mxu0
        %v501 = vadd.f32 %v188, %v500
        %v502 = vpop.f32.mrb[0].mxu0
        %v503 = vadd.f32 %v188, %v502
        %504 = vdwg.mxu0
        %505 = vst [vmem:[%s160] sm:$0xff] %v264
        %506 = vst [vmem:[%s160 + $0x8] sm:$0xff] %v266
        %507 = vst [vmem:[%s160 + $0x10] sm:$0xff] %v341
        %508 = vst [vmem:[%s160 + $0x18] sm:$0xff] %v343
        %509 = vst [vmem:[%s160 + $0x20] sm:$0xff] %v418
        %510 = vst [vmem:[%s160 + $0x28] sm:$0xff] %v420
        %511 = vst [vmem:[%s160 + $0x30] sm:$0xff] %v495
        %512 = vst [vmem:[%s160 + $0x38] sm:$0xff] %v497
        %513 = vst [vmem:[%s160 + $0x40] sm:$0xff] %v270
        %514 = vst [vmem:[%s160 + $0x48] sm:$0xff] %v272
        %515 = vst [vmem:[%s160 + $0x50] sm:$0xff] %v347
        %516 = vst [vmem:[%s160 + $0x58] sm:$0xff] %v349
        %517 = vst [vmem:[%s160 + $0x60] sm:$0xff] %v424
        %518 = vst [vmem:[%s160 + $0x68] sm:$0xff] %v426
        %519 = vst [vmem:[%s160 + $0x70] sm:$0xff] %v501
        %520 = vst [vmem:[%s160 + $0x78] sm:$0xff] %v503
        %s521 = sand.u32 %s90, 1
        %s522 = sand.u32 %s90, 1
        %s523 = smul.addr %s522, 128
        %s524 = scalar_lea.vmem [#allocation2], %s523
        // Predicated region
        $region33: #{_lambda_.5} parent=31 // pred_check
          %p525 = pneg %p100
        $region34: #{_lambda_.5} parent=31 // pred_check_branch
          %527 = sbr.rel (%p525) target = $region36
        $region35: #{_lambda_.5} parent=31 // pred_region
          %s528 = smul.u32 8, %s14
          %s529 = smul.addr %s528, 8
          %s530 = scalar_lea.vmem %s3, %s529
          // Predicated region
          $region37: #{_lambda_.5} parent=35 // pred_check
            _
          $region38: #{_lambda_.5} parent=35 // pred_check_branch
            %532 = sbr.rel (0) target = $region40
          $region39: #{_lambda_.5} parent=35 // pred_region
            // Predicated region
            $region41: #{_lambda_.5} parent=39 // pred_check
              _
            $region42: #{_lambda_.5} parent=39 // pred_check_branch
              %534 = sbr.rel (0) target = $region44
            $region43: #{_lambda_.5} parent=39 // pred_region
              loop: start=0, step=1, limit=1
              $region45: #{_lambda_.5} parent=43 // loop_pre_header
                _
              $region46: #{_lambda_.5} parent=43 // loop_header
                %s536 = sphi 0, %s540
                %p537 = scmp.ge.s32.totalorder %s536, 1
                %s541 = sphi %s524, %s524
                %s542 = sphi %s530, %s530
              $region47: #{_lambda_.5} parent=43 // loop_header_branch
                %539 = sbr.rel (%p537) target = $region51
              $region48: #{_lambda_.5} parent=43 // loop_body
                %v543 = vld [vmem:[%s541] sm:$0xff]
                %544 = vst [vmem:[%s542] sm:$0xff] %v543
                %v545 = vld [vmem:[%s541 + $0x8] sm:$0xff]
                %546 = vst [vmem:[%s542 + $0x8] sm:$0xff] %v545
                %v547 = vld [vmem:[%s541 + $0x10] sm:$0xff]
                %548 = vst [vmem:[%s542 + $0x10] sm:$0xff] %v547
                %v549 = vld [vmem:[%s541 + $0x18] sm:$0xff]
                %550 = vst [vmem:[%s542 + $0x18] sm:$0xff] %v549
                %v551 = vld [vmem:[%s541 + $0x20] sm:$0xff]
                %552 = vst [vmem:[%s542 + $0x20] sm:$0xff] %v551
                %v553 = vld [vmem:[%s541 + $0x28] sm:$0xff]
                %554 = vst [vmem:[%s542 + $0x28] sm:$0xff] %v553
                %v555 = vld [vmem:[%s541 + $0x30] sm:$0xff]
                %556 = vst [vmem:[%s542 + $0x30] sm:$0xff] %v555
                %v557 = vld [vmem:[%s541 + $0x38] sm:$0xff]
                %558 = vst [vmem:[%s542 + $0x38] sm:$0xff] %v557
                %v559 = vld [vmem:[%s541 + $0x40] sm:$0xff]
                %560 = vst [vmem:[%s542 + $0x80] sm:$0xff] %v559
                %v561 = vld [vmem:[%s541 + $0x48] sm:$0xff]
                %562 = vst [vmem:[%s542 + $0x88] sm:$0xff] %v561
                %v563 = vld [vmem:[%s541 + $0x50] sm:$0xff]
                %564 = vst [vmem:[%s542 + $0x90] sm:$0xff] %v563
                %v565 = vld [vmem:[%s541 + $0x58] sm:$0xff]
                %566 = vst [vmem:[%s542 + $0x98] sm:$0xff] %v565
                %v567 = vld [vmem:[%s541 + $0x60] sm:$0xff]
                %568 = vst [vmem:[%s542 + $0xa0] sm:$0xff] %v567
                %v569 = vld [vmem:[%s541 + $0x68] sm:$0xff]
                %570 = vst [vmem:[%s542 + $0xa8] sm:$0xff] %v569
                %v571 = vld [vmem:[%s541 + $0x70] sm:$0xff]
                %572 = vst [vmem:[%s542 + $0xb0] sm:$0xff] %v571
                %v573 = vld [vmem:[%s541 + $0x78] sm:$0xff]
                %574 = vst [vmem:[%s542 + $0xb8] sm:$0xff] %v573
              $region49: #{_lambda_.5} parent=43 // loop_footer
                %s540 = sadd.s32 1, %s536
              $region50: #{_lambda_.5} parent=43 // loop_footer_branch
                %535 = sbr.rel target = $region46
              $region51: #{_lambda_.5} parent=43 // loop_exit
                _
            $region44: #{_lambda_.5} parent=39 // pred_fallthru
              _
            // Predicated region
            $region52: #{_lambda_.5} parent=39 // pred_check
              _
            $region53: #{_lambda_.5} parent=39 // pred_check_branch
              %576 = sbr.rel target = $region55
            $region54: #{_lambda_.5} parent=39 // pred_region
              _
            $region55: #{_lambda_.5} parent=39 // pred_fallthru
              _
          $region40: #{_lambda_.5} parent=35 // pred_fallthru
            _
          %577 = vnop
        $region36: #{_lambda_.5} parent=31 // pred_fallthru
          _
      $region32: #{_lambda_.5} parent=5 // pred_fallthru
        _
      %p578 = scmp.le.s32.totalorder 2, %s9
      // Predicated region
      $region56: #{_lambda_.5} parent=5 // pred_check
        %p579 = pneg %p578
      $region57: #{_lambda_.5} parent=5 // pred_check_branch
        %581 = sbr.rel (%p579) target = $region59
      $region58: #{_lambda_.5} parent=5 // pred_region
        %s582 = ssub.s32 %s9, 2
        // Predicated region
        $region60: #{_lambda_.5} parent=58 // pred_check
          %p583 = pneg %p106
        $region61: #{_lambda_.5} parent=58 // pred_check_branch
          %585 = sbr.rel (%p583) target = $region63
        $region62: #{_lambda_.5} parent=58 // pred_region
          %s586 = sand.u32 %s91, 1
          %s587 = sand.u32 %s91, 1
          %s588 = smul.addr %s587, 128
          %s589 = scalar_lea.vmem [#allocation2], %s588
        $region63: #{_lambda_.5} parent=58 // pred_fallthru
          _
      $region59: #{_lambda_.5} parent=5 // pred_fallthru
        _
    $region6: #{_lambda_.5} parent=1 // loop_footer
      %s13 = sadd.s32 1, %s9
    $region7: #{_lambda_.5} parent=1 // loop_footer_branch
      %8 = sbr.rel target = $region3
    $region8: #{_lambda_.5} parent=1 // loop_exit
      _

</llo_original>
